<compile_context>
chip_gen: v6e
topology: v6e:2x2x1
jax: 0.10.0
libtpu: 0.0.40
codegen_flags: <defaults>
</compile_context>

<pallas_src>
import functools

import jax
import jax.numpy as jnp
import numpy as np
from jax.experimental import pallas as pl
from jax.experimental.pallas import tpu as pltpu


def _round_up(x, m):
    return (x + m - 1) // m * m


def _cdiv(a, b):
    return (a + b - 1) // b


# ----------------------------- Pallas kernel --------------------------------
def dtmp_kernel(bias_ref, h_dst_ref, edge_ref,
                wq_ref, bq_ref, wkv_ref, bkv_ref,
                wout_a_ref, wout_h_ref, bout_ref, ln_g_ref, ln_b_ref,
                out_ref, *, n_nbr, dim_out):
    T = h_dst_ref.shape[0]          # dst nodes in this tile
    Do = dim_out

    h_dst = h_dst_ref[...]          # (T, Fn)            compute dtype
    edge_in = edge_ref[...]         # (T*Nn, Fn+Fe+Dt)   compute dtype

    # ---- Q = w_q(cat([h_dst, zero_time_feat])); zero_time folded into bias ----
    Q = jnp.dot(h_dst, wq_ref[...],
                preferred_element_type=jnp.float32) + bq_ref[...]       # (T, Do) f32

    # ---- single fused MXU matmul: [K | V] = [h_nbr|edge_f|time] @ [w_k|w_v] ----
    KV = jnp.dot(edge_in, wkv_ref[...],
                 preferred_element_type=jnp.float32) + bkv_ref[...]     # (T*Nn, 2Do)
    KV3 = KV.reshape(T, n_nbr, 2 * Do)      # free relabel when n_nbr == 8
    K3 = KV3[..., :Do]                      # (T, Nn, Do)
    V3 = KV3[..., Do:]                      # (T, Nn, Do)

    # ---- attention (keepdims 3-D, all reductions stay inside each slab) ----
    bias_sum = bias_ref[0, 0]                                           # SMEM scalar
    score = jnp.sum(Q[:, None, :] * K3, axis=-1, keepdims=True) + bias_sum  # (T,Nn,1)
    score = jnp.where(score > 0, score, 0.2 * score)                    # LeakyReLU(0.2)
    m = jnp.max(score, axis=1, keepdims=True)                           # (T,1,1)
    p = jnp.exp(score - m)                                              # (T,Nn,1)
    att = p * pl.reciprocal(jnp.sum(p, axis=1, keepdims=True), approx=True)

    # ---- message passing: sum over incoming edges of att * V ----
    agg = jnp.sum(V3 * att, axis=1)                                     # (T, Do) f32

    # ---- rst = layer_norm(relu(w_out(cat([agg, h_dst])))) ----
    rst = (jnp.dot(agg.astype(h_dst.dtype), wout_a_ref[...],
                   preferred_element_type=jnp.float32)
           + jnp.dot(h_dst, wout_h_ref[...], preferred_element_type=jnp.float32)
           + bout_ref[...])                                             # (T, Dp) f32
    rst = jnp.maximum(rst, 0.0)                                         # dropout == identity

    # LayerNorm over the real Do lanes (padded lanes of rst are exactly 0,
    # so plain lane sums with a 1/Do scale are correct).
    inv_do = 1.0 / Do
    s1 = jnp.sum(rst, axis=-1, keepdims=True)
    s2 = jnp.sum(rst * rst, axis=-1, keepdims=True)
    mean = s1 * inv_do
    var = s2 * inv_do - mean * mean
    normed = (rst - mean) * jax.lax.rsqrt(var + 1e-5)
    out_ref[...] = normed * ln_g_ref[...] + ln_b_ref[...]


# ------------------------------ wrapper --------------------------------------
def _blk_bytes(rows, cols, itemsize):
    sub = 8 * (4 // itemsize)                 # f32 -> 8 sublanes, bf16 -> 16
    return _round_up(max(rows, 1), sub) * _round_up(max(cols, 1), 128) * itemsize


def dtmp_forward_pallas(params, h_dst, h_nbr, edge_f, edge_dt, *,
                        tile=512, num_head=1, compute_dtype=jnp.bfloat16,
                        return_padded=False):
    # att_bias broadcast in the PyTorch code is only consistent for 1 head.
    assert num_head == 1, "num_head must be 1 for the seperate=False att_bias path"

    N_dst, Fn = h_dst.shape
    _, Nn, Fe = edge_f.shape
    Dt = params["w_time"].shape[1]
    Do = params["b_q"].shape[1]
    Dp = _round_up(Do, 128)                   # lane-dense output width
    Fkv = Fn + Fe + Dt
    cd = np.dtype(compute_dtype)
    csz = cd.itemsize

    # ---- tile clamp; keep grid extent >= 2 when possible (v7x has 2 TCs) ----
    tile = max(8, min(_round_up(int(tile), 8), _round_up(N_dst, 8)))
    if N_dst > 8 and _cdiv(N_dst, tile) < 2:
        tile = _round_up(_cdiv(N_dst, 2), 8)
    grid = (_cdiv(N_dst, tile),)              # cdiv grid: no host-side row padding

    # ---- fused edge slab: [h_nbr | edge_f | cos(dt * w_time)], cast once ----
    time_feat = jnp.cos(edge_dt[:, :, None] * params["w_time"][0])
    edge_in = jnp.concatenate(
        [h_nbr.astype(cd), edge_f.astype(cd), time_feat.astype(cd)],
        axis=-1).reshape(N_dst * Nn, Fkv)
    h_dst_c = h_dst.astype(cd)

    # ---- parameter prep: fold constants, pack [w_k|w_v], pad output to Dp ----
    def padc(x):
        return jnp.pad(x, ((0, 0), (0, Dp - Do)))

    w_q_n = params["w_q"][:Fn, :].astype(cd)                                   # (Fn, Do)
    b_q_eff = (params["b_q"]                                                   # cos(0*w)==1
               + jnp.sum(params["w_q"][Fn:, :], axis=0, keepdims=True))        # (1, Do) f32
    w_kv = jnp.concatenate([params["w_k"], params["w_v"]], axis=1).astype(cd)  # (Fkv, 2Do)
    b_kv = jnp.concatenate([params["b_k"], params["b_v"]], axis=1)             # (1, 2Do) f32
    w_out_a = padc(params["w_out"][:Do, :]).astype(cd)                         # (Do, Dp)
    w_out_h = padc(params["w_out"][Do:, :]).astype(cd)                         # (Fn, Dp)
    b_out_p = padc(params["b_out"])                                            # (1, Dp) f32
    ln_g_p = padc(params["ln_g"])
    ln_b_p = padc(params["ln_b"])
    bias_sum = jnp.sum(params["att_bias"]).reshape(1, 1).astype(jnp.float32)   # SMEM scalar

    fixed = lambda r, c: pl.BlockSpec((r, c), lambda i: (0, 0))
    in_specs = [
        pl.BlockSpec(memory_space=pltpu.MemorySpace.SMEM),        # sum(att_bias)
        pl.BlockSpec((tile, Fn), lambda i: (i, 0)),               # h_dst
        pl.BlockSpec((tile * Nn, Fkv), lambda i: (i, 0)),         # fused edge slab
        fixed(Fn, Do), fixed(1, Do),                              # w_q (node part), b_q'
        fixed(Fkv, 2 * Do), fixed(1, 2 * Do),                     # [w_k|w_v], [b_k|b_v]
        fixed(Do, Dp), fixed(Fn, Dp), fixed(1, Dp),               # w_out(agg), w_out(h), b_out
        fixed(1, Dp), fixed(1, Dp),                               # ln_g, ln_b
    ]
    out_specs = pl.BlockSpec((tile, Dp), lambda i: (i, 0))

    # ---- VMEM budget from the actual double-buffered footprint ----
    stream = (_blk_bytes(tile, Fn, csz) + _blk_bytes(tile * Nn, Fkv, csz)
              + _blk_bytes(tile, Dp, 4))
    consts = (_blk_bytes(Fn, Do, csz) + _blk_bytes(1, Do, 4)
              + _blk_bytes(Fkv, 2 * Do, csz) + _blk_bytes(1, 2 * Do, 4)
              + _blk_bytes(Do, Dp, csz) + _blk_bytes(Fn, Dp, csz)
              + 3 * _blk_bytes(1, Dp, 4))
    vmem_need = 2 * (stream + consts) + (4 << 20)      # 2x buffers + Mosaic slack
    vmem_limit = int(min(max(vmem_need, 16 << 20), 56 << 20))

    # ---- advisory cost estimate (lets XLA overlap this call in a bigger step) ----
    M = N_dst * Nn
    flops = int(2 * M * Fkv * 2 * Do            # fused KV matmul
                + 2 * N_dst * Fn * Do           # Q matmul
                + 2 * N_dst * (Do + Fn) * Dp    # output matmuls
                + 6 * M * Do)                   # attention elementwise
    transcendentals = int(M + 2 * N_dst)
    bytes_accessed = int(h_dst_c.size * csz + edge_in.size * csz + N_dst * Dp * 4
                         + (w_q_n.size + w_kv.size + w_out_a.size + w_out_h.size) * csz)

    out = pl.pallas_call(
        functools.partial(dtmp_kernel, n_nbr=Nn, dim_out=Do),
        out_shape=jax.ShapeDtypeStruct((N_dst, Dp), jnp.float32),
        grid=grid,
        in_specs=in_specs,
        out_specs=out_specs,
        compiler_params=pltpu.CompilerParams(
            dimension_semantics=("parallel",),
            vmem_limit_bytes=vmem_limit),
        cost_estimate=pl.CostEstimate(flops=flops,
                                      transcendentals=transcendentals,
                                      bytes_accessed=bytes_accessed),
    )(bias_sum, h_dst_c, edge_in,
      w_q_n, b_q_eff, w_kv, b_kv,
      w_out_a, w_out_h, b_out_p, ln_g_p, ln_b_p)

    if return_padded:          # keep the lane-dense padded layout end-to-end
        return out
    return out[:, :Do]


# --------------------------- pure-JAX reference ------------------------------
def dtmp_forward_ref(params, h_dst, h_nbr, edge_f, edge_dt):
    hp = jax.lax.Precision.HIGHEST
    N_dst, Fn = h_dst.shape
    Dt = params["w_time"].shape[1]

    time_feat = jnp.cos(edge_dt[:, :, None] * params["w_time"][0])
    zero_time = jnp.ones((N_dst, Dt), jnp.float32)                 # cos(0 * w)

    Q = jnp.dot(jnp.concatenate([h_dst, zero_time], axis=1),
                params["w_q"], precision=hp) + params["b_q"]
    kv_in = jnp.concatenate([h_nbr, edge_f, time_feat], axis=-1)
    K = jnp.einsum('tnf,fd->tnd', kv_in, params["w_k"], precision=hp) + params["b_k"]
    V = jnp.einsum('tnf,fd->tnd', kv_in, params["w_v"], precision=hp) + params["b_v"]

    score = jnp.sum(Q[:, None, :] * K, axis=-1) + jnp.sum(params["att_bias"])
    score = jnp.where(score > 0, score, 0.2 * score)
    att = jax.nn.softmax(score, axis=-1)
    agg = jnp.sum(V * att[:, :, None], axis=1)

    rst = jnp.dot(jnp.concatenate([agg, h_dst], axis=1),
                  params["w_out"], precision=hp) + params["b_out"]
    rst = jnp.maximum(rst, 0.0)
    mean = jnp.mean(rst, axis=-1, keepdims=True)
    var = jnp.mean((rst - mean) ** 2, axis=-1, keepdims=True)
    return (rst - mean) * jax.lax.rsqrt(var + 1e-5) * params["ln_g"] + params["ln_b"]


# ------------------------------- params --------------------------------------
def init_params(key, dim_node_feat, dim_edge_feat, dim_time, dim_out):
    ks = jax.random.split(key, 8)
    d_qkv_q = dim_node_feat + dim_time
    d_qkv_kv = dim_node_feat + dim_edge_feat + dim_time
    d_out_in = dim_node_feat + dim_out

    def lin_w(k, fan_in, fan_out):
        b = 1.0 / np.sqrt(fan_in)
        return jax.random.uniform(k, (fan_in, fan_out), jnp.float32, -b, b)

    return {
        # TimeEncode weight: 1 / 10**linspace(0, 9, dim_time), bias = 0
        "w_time": jnp.asarray(
            1.0 / 10 ** np.linspace(0, 9, dim_time, dtype=np.float32)
        ).reshape(1, dim_time),
        "w_q": lin_w(ks[0], d_qkv_q, dim_out),
        "b_q": jnp.zeros((1, dim_out), jnp.float32),
        "w_k": lin_w(ks[1], d_qkv_kv, dim_out),
        "b_k": 0.01 * jax.random.normal(ks[2], (1, dim_out), jnp.float32),
        "w_v": lin_w(ks[3], d_qkv_kv, dim_out),
        "b_v": 0.01 * jax.random.normal(ks[4], (1, dim_out), jnp.float32),
        "att_bias": 0.01 * jax.random.normal(ks[5], (1, dim_out), jnp.float32),
        "w_out": lin_w(ks[6], d_out_in, dim_out),
        "b_out": 0.01 * jax.random.normal(ks[7], (1, dim_out), jnp.float32),
        "ln_g": jnp.ones((1, dim_out), jnp.float32),   # LayerNorm defaults
        "ln_b": jnp.zeros((1, dim_out), jnp.float32),
    }


def _make_inputs(key, n_dst, n_nbr, dim_node_feat, dim_edge_feat):
    k1, k2, k3, k4 = jax.random.split(key, 4)
    h_dst = jax.random.normal(k1, (n_dst, dim_node_feat), jnp.float32)
    h_nbr = jax.random.normal(k2, (n_dst, n_nbr, dim_node_feat), jnp.float32)
    edge_f = jax.random.normal(k3, (n_dst, n_nbr, dim_edge_feat), jnp.float32)
    edge_dt = jax.random.uniform(k4, (n_dst, n_nbr), jnp.float32, 0.0, 100.0)
    return h_dst, h_nbr, edge_f, edge_dt


# --------------------------------- main ---------------------------------------
if __name__ == "__main__":
    dim_node_feat, dim_edge_feat, dim_time, dim_out = 32, 16, 16, 32
    n_nbr = 8

    key = jax.random.PRNGKey(0)
    kp, ka, kb = jax.random.split(key, 3)
    params = init_params(kp, dim_node_feat, dim_edge_feat, dim_time, dim_out)

    # 1) f32 operands, small problem, grid split across 2 steps (v7x-friendly)
    ins_a = _make_inputs(ka, 16, n_nbr, dim_node_feat, dim_edge_feat)
    out_a = jax.block_until_ready(
        dtmp_forward_pallas(params, *ins_a, compute_dtype=jnp.float32))
    ref_a = dtmp_forward_ref(params, *ins_a)
    np.testing.assert_allclose(np.asarray(out_a), np.asarray(ref_a),
                               rtol=5e-3, atol=5e-3)

    # 2) ragged N_dst (grid does not divide evenly -> clipped final block), f32
    ins_b = _make_inputs(kb, 40, n_nbr, dim_node_feat, dim_edge_feat)
    out_b = jax.block_until_ready(
        dtmp_forward_pallas(params, *ins_b, tile=16, compute_dtype=jnp.float32))
    ref_b = dtmp_forward_ref(params, *ins_b)
    np.testing.assert_allclose(np.asarray(out_b), np.asarray(ref_b),
                               rtol=5e-3, atol=5e-3)

    # 3) default bf16 matmul operands (f32 accumulation / softmax / LayerNorm):
    #    compared against the f32 HIGHEST reference with a relaxed tolerance.
    out_c = jax.block_until_ready(dtmp_forward_pallas(params, *ins_b, tile=16))
    np.testing.assert_allclose(np.asarray(out_c), np.asarray(ref_b),
                               rtol=1e-1, atol=1e-1)

    print("KERNEL_OK")
</pallas_src>

<mosaic_0001>
module attributes {stable_mosaic.version = 11 : i64} {
  func.func @dtmp_kernel(%arg0: i32, %arg1: memref<1x1xf32, #tpu.memory_space<smem>>, %arg2: memref<8x32xf32, #tpu.memory_space<vmem>>, %arg3: memref<64x64xf32, #tpu.memory_space<vmem>>, %arg4: memref<32x32xf32, #tpu.memory_space<vmem>>, %arg5: memref<1x32xf32, #tpu.memory_space<vmem>>, %arg6: memref<64x64xf32, #tpu.memory_space<vmem>>, %arg7: memref<1x64xf32, #tpu.memory_space<vmem>>, %arg8: memref<32x128xf32, #tpu.memory_space<vmem>>, %arg9: memref<32x128xf32, #tpu.memory_space<vmem>>, %arg10: memref<1x128xf32, #tpu.memory_space<vmem>>, %arg11: memref<1x128xf32, #tpu.memory_space<vmem>>, %arg12: memref<1x128xf32, #tpu.memory_space<vmem>>, %arg13: memref<8x128xf32, #tpu.memory_space<vmem>>) attributes {dimension_semantics = [#tpu.dimension_semantics<parallel>], iteration_bounds = array<i64: 2>, scalar_prefetch = 0 : i64, scratch_operands = 0 : i64, tpu.core_type = #tpu.core_type<tc>, window_params = [{transform_indices = @transform_0, window_bounds = array<i64: 1, 1>}, {transform_indices = @transform_1, window_bounds = array<i64: 8, 32>}, {transform_indices = @transform_2, window_bounds = array<i64: 64, 64>}, {pipeline_mode = #tpu.pipeline_mode<synchronous>, transform_indices = @transform_3, window_bounds = array<i64: 32, 32>}, {pipeline_mode = #tpu.pipeline_mode<synchronous>, transform_indices = @transform_4, window_bounds = array<i64: 1, 32>}, {pipeline_mode = #tpu.pipeline_mode<synchronous>, transform_indices = @transform_5, window_bounds = array<i64: 64, 64>}, {pipeline_mode = #tpu.pipeline_mode<synchronous>, transform_indices = @transform_6, window_bounds = array<i64: 1, 64>}, {pipeline_mode = #tpu.pipeline_mode<synchronous>, transform_indices = @transform_7, window_bounds = array<i64: 32, 128>}, {pipeline_mode = #tpu.pipeline_mode<synchronous>, transform_indices = @transform_8, window_bounds = array<i64: 32, 128>}, {pipeline_mode = #tpu.pipeline_mode<synchronous>, transform_indices = @transform_9, window_bounds = array<i64: 1, 128>}, {pipeline_mode = #tpu.pipeline_mode<synchronous>, transform_indices = @transform_10, window_bounds = array<i64: 1, 128>}, {pipeline_mode = #tpu.pipeline_mode<synchronous>, transform_indices = @transform_11, window_bounds = array<i64: 1, 128>}, {transform_indices = @transform_12, window_bounds = array<i64: 8, 128>}]} {
    %c0 = arith.constant 0 : index
    %c0_0 = arith.constant 0 : index
    %0 = vector.load %arg2[%c0, %c0_0] : memref<8x32xf32, #tpu.memory_space<vmem>>, vector<8x32xf32>
    %c0_1 = arith.constant 0 : index
    %c0_2 = arith.constant 0 : index
    %1 = vector.load %arg3[%c0_1, %c0_2] : memref<64x64xf32, #tpu.memory_space<vmem>>, vector<64x64xf32>
    %c0_3 = arith.constant 0 : index
    %c0_4 = arith.constant 0 : index
    %2 = vector.load %arg4[%c0_3, %c0_4] : memref<32x32xf32, #tpu.memory_space<vmem>>, vector<32x32xf32>
    %cst = arith.constant dense<0.000000e+00> : vector<8x32xf32>
    %3 = tpu.matmul %0, %2, %cst {dimension_numbers = #tpu.dot_dimension_numbers<[1], [0], [0], [1], [0, 0, 1, 1], [], []>} : vector<8x32xf32>, vector<32x32xf32>, vector<8x32xf32> -> vector<8x32xf32>
    %c0_5 = arith.constant 0 : index
    %c0_6 = arith.constant 0 : index
    %4 = vector.load %arg5[%c0_5, %c0_6] : memref<1x32xf32, #tpu.memory_space<vmem>>, vector<1x32xf32>
    %5 = vector.broadcast %4 : vector<1x32xf32> to vector<8x32xf32>
    %6 = arith.addf %3, %5 : vector<8x32xf32>
    %c0_7 = arith.constant 0 : index
    %c0_8 = arith.constant 0 : index
    %7 = vector.load %arg6[%c0_7, %c0_8] : memref<64x64xf32, #tpu.memory_space<vmem>>, vector<64x64xf32>
    %cst_9 = arith.constant dense<0.000000e+00> : vector<64x64xf32>
    %8 = tpu.matmul %1, %7, %cst_9 {dimension_numbers = #tpu.dot_dimension_numbers<[1], [0], [0], [1], [0, 0, 1, 1], [], []>} : vector<64x64xf32>, vector<64x64xf32>, vector<64x64xf32> -> vector<64x64xf32>
    %c0_10 = arith.constant 0 : index
    %c0_11 = arith.constant 0 : index
    %9 = vector.load %arg7[%c0_10, %c0_11] : memref<1x64xf32, #tpu.memory_space<vmem>>, vector<1x64xf32>
    %10 = vector.broadcast %9 : vector<1x64xf32> to vector<64x64xf32>
    %11 = arith.addf %8, %10 : vector<64x64xf32>
    %12 = vector.shape_cast %11 : vector<64x64xf32> to vector<8x8x64xf32>
    %13 = vector.extract_strided_slice %12 {offsets = [0, 0, 0], sizes = [8, 8, 32], strides = [1, 1, 1]} : vector<8x8x64xf32> to vector<8x8x32xf32>
    %14 = vector.extract_strided_slice %12 {offsets = [0, 0, 32], sizes = [8, 8, 32], strides = [1, 1, 1]} : vector<8x8x64xf32> to vector<8x8x32xf32>
    %c0_12 = arith.constant 0 : index
    %c0_13 = arith.constant 0 : index
    %15 = memref.load %arg1[%c0_12, %c0_13] : memref<1x1xf32, #tpu.memory_space<smem>>
    %16 = vector.shape_cast %6 : vector<8x32xf32> to vector<8x1x32xf32>
    %17 = vector.broadcast %16 : vector<8x1x32xf32> to vector<8x8x32xf32>
    %18 = arith.mulf %17, %13 : vector<8x8x32xf32>
    %cst_14 = arith.constant dense<0.000000e+00> : vector<8x8xf32>
    %19 = vector.multi_reduction <add>, %18, %cst_14 [2] : vector<8x8x32xf32> to vector<8x8xf32>
    %20 = vector.shape_cast %19 : vector<8x8xf32> to vector<8x8x1xf32>
    %21 = vector.broadcast %15 : f32 to vector<8x8x1xf32>
    %22 = arith.addf %20, %21 : vector<8x8x1xf32>
    %cst_15 = arith.constant 0.000000e+00 : f32
    %23 = vector.broadcast %cst_15 : f32 to vector<8x8x1xf32>
    %24 = arith.cmpf ogt, %22, %23 : vector<8x8x1xf32>
    %cst_16 = arith.constant 2.000000e-01 : f32
    %25 = vector.broadcast %cst_16 : f32 to vector<8x8x1xf32>
    %26 = arith.mulf %25, %22 : vector<8x8x1xf32>
    %27 = arith.select %24, %22, %26 : vector<8x8x1xi1>, vector<8x8x1xf32>
    %cst_17 = arith.constant dense<0xFF800000> : vector<8x1xf32>
    %28 = vector.multi_reduction <maximumf>, %27, %cst_17 [1] : vector<8x8x1xf32> to vector<8x1xf32>
    %29 = vector.shape_cast %28 : vector<8x1xf32> to vector<8x1x1xf32>
    %30 = vector.broadcast %29 : vector<8x1x1xf32> to vector<8x8x1xf32>
    %31 = arith.subf %27, %30 : vector<8x8x1xf32>
    %32 = math.exp %31 : vector<8x8x1xf32>
    %cst_18 = arith.constant dense<0.000000e+00> : vector<8x1xf32>
    %33 = vector.multi_reduction <add>, %32, %cst_18 [1] : vector<8x8x1xf32> to vector<8x1xf32>
    %34 = vector.shape_cast %33 : vector<8x1xf32> to vector<8x1x1xf32>
    %35 = tpu.reciprocal %34 {approx = true} : vector<8x1x1xf32> -> vector<8x1x1xf32>
    %36 = vector.broadcast %35 : vector<8x1x1xf32> to vector<8x8x1xf32>
    %37 = arith.mulf %32, %36 : vector<8x8x1xf32>
    %38 = vector.broadcast %37 : vector<8x8x1xf32> to vector<8x8x32xf32>
    %39 = arith.mulf %14, %38 : vector<8x8x32xf32>
    %cst_19 = arith.constant dense<0.000000e+00> : vector<8x32xf32>
    %40 = vector.multi_reduction <add>, %39, %cst_19 [1] : vector<8x8x32xf32> to vector<8x32xf32>
    %c0_20 = arith.constant 0 : index
    %c0_21 = arith.constant 0 : index
    %41 = vector.load %arg8[%c0_20, %c0_21] : memref<32x128xf32, #tpu.memory_space<vmem>>, vector<32x128xf32>
    %cst_22 = arith.constant dense<0.000000e+00> : vector<8x128xf32>
    %42 = tpu.matmul %40, %41, %cst_22 {dimension_numbers = #tpu.dot_dimension_numbers<[1], [0], [0], [1], [0, 0, 1, 1], [], []>} : vector<8x32xf32>, vector<32x128xf32>, vector<8x128xf32> -> vector<8x128xf32>
    %c0_23 = arith.constant 0 : index
    %c0_24 = arith.constant 0 : index
    %43 = vector.load %arg9[%c0_23, %c0_24] : memref<32x128xf32, #tpu.memory_space<vmem>>, vector<32x128xf32>
    %cst_25 = arith.constant dense<0.000000e+00> : vector<8x128xf32>
    %44 = tpu.matmul %0, %43, %cst_25 {dimension_numbers = #tpu.dot_dimension_numbers<[1], [0], [0], [1], [0, 0, 1, 1], [], []>} : vector<8x32xf32>, vector<32x128xf32>, vector<8x128xf32> -> vector<8x128xf32>
    %45 = arith.addf %42, %44 : vector<8x128xf32>
    %c0_26 = arith.constant 0 : index
    %c0_27 = arith.constant 0 : index
    %46 = vector.load %arg10[%c0_26, %c0_27] : memref<1x128xf32, #tpu.memory_space<vmem>>, vector<1x128xf32>
    %47 = vector.broadcast %46 : vector<1x128xf32> to vector<8x128xf32>
    %48 = arith.addf %45, %47 : vector<8x128xf32>
    %cst_28 = arith.constant 0.000000e+00 : f32
    %49 = vector.broadcast %cst_28 : f32 to vector<8x128xf32>
    %50 = arith.maximumf %48, %49 : vector<8x128xf32>
    %cst_29 = arith.constant dense<0.000000e+00> : vector<8xf32>
    %51 = vector.multi_reduction <add>, %50, %cst_29 [1] : vector<8x128xf32> to vector<8xf32>
    %52 = vector.shape_cast %51 : vector<8xf32> to vector<8x1xf32>
    %53 = arith.mulf %50, %50 : vector<8x128xf32>
    %cst_30 = arith.constant dense<0.000000e+00> : vector<8xf32>
    %54 = vector.multi_reduction <add>, %53, %cst_30 [1] : vector<8x128xf32> to vector<8xf32>
    %55 = vector.shape_cast %54 : vector<8xf32> to vector<8x1xf32>
    %cst_31 = arith.constant 3.125000e-02 : f32
    %56 = vector.broadcast %cst_31 : f32 to vector<8x1xf32>
    %57 = arith.mulf %52, %56 : vector<8x1xf32>
    %cst_32 = arith.constant 3.125000e-02 : f32
    %58 = vector.broadcast %cst_32 : f32 to vector<8x1xf32>
    %59 = arith.mulf %55, %58 : vector<8x1xf32>
    %60 = arith.mulf %57, %57 : vector<8x1xf32>
    %61 = arith.subf %59, %60 : vector<8x1xf32>
    %62 = vector.broadcast %57 : vector<8x1xf32> to vector<8x128xf32>
    %63 = arith.subf %50, %62 : vector<8x128xf32>
    %cst_33 = arith.constant 9.99999974E-6 : f32
    %64 = vector.broadcast %cst_33 : f32 to vector<8x1xf32>
    %65 = arith.addf %61, %64 : vector<8x1xf32>
    %66 = math.rsqrt %65 : vector<8x1xf32>
    %67 = vector.broadcast %66 : vector<8x1xf32> to vector<8x128xf32>
    %68 = arith.mulf %63, %67 : vector<8x128xf32>
    %c0_34 = arith.constant 0 : index
    %c0_35 = arith.constant 0 : index
    %69 = vector.load %arg11[%c0_34, %c0_35] : memref<1x128xf32, #tpu.memory_space<vmem>>, vector<1x128xf32>
    %70 = vector.broadcast %69 : vector<1x128xf32> to vector<8x128xf32>
    %71 = arith.mulf %68, %70 : vector<8x128xf32>
    %c0_36 = arith.constant 0 : index
    %c0_37 = arith.constant 0 : index
    %72 = vector.load %arg12[%c0_36, %c0_37] : memref<1x128xf32, #tpu.memory_space<vmem>>, vector<1x128xf32>
    %73 = vector.broadcast %72 : vector<1x128xf32> to vector<8x128xf32>
    %74 = arith.addf %71, %73 : vector<8x128xf32>
    %c0_38 = arith.constant 0 : index
    %c0_39 = arith.constant 0 : index
    %75 = vector.load %arg13[%c0_38, %c0_39] : memref<8x128xf32, #tpu.memory_space<vmem>>, vector<8x128xf32>
    tpu.vector_store %arg13[%c0_38, %c0_39], %74 {strides = array<i32>} : memref<8x128xf32, #tpu.memory_space<vmem>>, vector<8x128xf32>,
    return
  }
  func.func @transform_0(%arg0: i32) -> (i32, i32) {
    %c0_i32 = arith.constant 0 : i32
    %c0_i32_0 = arith.constant 0 : i32
    %c0_i32_1 = arith.constant 0 : i32
    return %c0_i32, %c0_i32_0 : i32, i32
  }
  func.func @transform_1(%arg0: i32) -> (i32, i32) {
    %c0_i32 = arith.constant 0 : i32
    %c0_i32_0 = arith.constant 0 : i32
    return %arg0, %c0_i32 : i32, i32
  }
  func.func @transform_2(%arg0: i32) -> (i32, i32) {
    %c0_i32 = arith.constant 0 : i32
    %c0_i32_0 = arith.constant 0 : i32
    return %arg0, %c0_i32 : i32, i32
  }
  func.func @transform_3(%arg0: i32) -> (i32, i32) {
    %c0_i32 = arith.constant 0 : i32
    %c0_i32_0 = arith.constant 0 : i32
    %c0_i32_1 = arith.constant 0 : i32
    return %c0_i32, %c0_i32_0 : i32, i32
  }
  func.func @transform_4(%arg0: i32) -> (i32, i32) {
    %c0_i32 = arith.constant 0 : i32
    %c0_i32_0 = arith.constant 0 : i32
    %c0_i32_1 = arith.constant 0 : i32
    return %c0_i32, %c0_i32_0 : i32, i32
  }
  func.func @transform_5(%arg0: i32) -> (i32, i32) {
    %c0_i32 = arith.constant 0 : i32
    %c0_i32_0 = arith.constant 0 : i32
    %c0_i32_1 = arith.constant 0 : i32
    return %c0_i32, %c0_i32_0 : i32, i32
  }
  func.func @transform_6(%arg0: i32) -> (i32, i32) {
    %c0_i32 = arith.constant 0 : i32
    %c0_i32_0 = arith.constant 0 : i32
    %c0_i32_1 = arith.constant 0 : i32
    return %c0_i32, %c0_i32_0 : i32, i32
  }
  func.func @transform_7(%arg0: i32) -> (i32, i32) {
    %c0_i32 = arith.constant 0 : i32
    %c0_i32_0 = arith.constant 0 : i32
    %c0_i32_1 = arith.constant 0 : i32
    return %c0_i32, %c0_i32_0 : i32, i32
  }
  func.func @transform_8(%arg0: i32) -> (i32, i32) {
    %c0_i32 = arith.constant 0 : i32
    %c0_i32_0 = arith.constant 0 : i32
    %c0_i32_1 = arith.constant 0 : i32
    return %c0_i32, %c0_i32_0 : i32, i32
  }
  func.func @transform_9(%arg0: i32) -> (i32, i32) {
    %c0_i32 = arith.constant 0 : i32
    %c0_i32_0 = arith.constant 0 : i32
    %c0_i32_1 = arith.constant 0 : i32
    return %c0_i32, %c0_i32_0 : i32, i32
  }
  func.func @transform_10(%arg0: i32) -> (i32, i32) {
    %c0_i32 = arith.constant 0 : i32
    %c0_i32_0 = arith.constant 0 : i32
    %c0_i32_1 = arith.constant 0 : i32
    return %c0_i32, %c0_i32_0 : i32, i32
  }
  func.func @transform_11(%arg0: i32) -> (i32, i32) {
    %c0_i32 = arith.constant 0 : i32
    %c0_i32_0 = arith.constant 0 : i32
    %c0_i32_1 = arith.constant 0 : i32
    return %c0_i32, %c0_i32_0 : i32, i32
  }
  func.func @transform_12(%arg0: i32) -> (i32, i32) {
    %c0_i32 = arith.constant 0 : i32
    %c0_i32_0 = arith.constant 0 : i32
    return %arg0, %c0_i32 : i32, i32
  }
}

</mosaic_0001>

<llo_original>
// kernel: tpu_custom_call.1
$region0: #{tpu_custom_call.1}
  #allocation0 [shape = 'u32[]', space=smem, size = 0x4, offset = 0x4, fixed_abs, tag = 'smem constant byte address 0x4 - core index']
  #allocation1 [shape = 'u32[144,128]{1,0:T(1,128)}', space=vmem, size = 0x12000, scoped, tag = 'internal scratch']
  #allocation2 [shape = 'f32[1,1]{1,0:T(1,128)S(6)}', space=smem, size = 0x200, scoped, tag = 'scoped memory for tpu_custom_call.1']
  %s0 = inlined_call_operand.<no memory space> [shape: f32[1,1], index: 0, kind: input, shape index: {}]
  %s1 = inlined_call_operand.vmem [shape: f32[16,32], index: 1, kind: input, shape index: {}]
  %s2 = inlined_call_operand.vmem [shape: f32[128,64], index: 2, kind: input, shape index: {}]
  %s3 = inlined_call_operand.vmem [shape: f32[32,32], index: 3, kind: input, shape index: {}]
  %s4 = inlined_call_operand.vmem [shape: f32[1,32], index: 4, kind: input, shape index: {}]
  %s5 = inlined_call_operand.vmem [shape: f32[64,64], index: 5, kind: input, shape index: {}]
  %s6 = inlined_call_operand.vmem [shape: f32[1,64], index: 6, kind: input, shape index: {}]
  %s7 = inlined_call_operand.vmem [shape: f32[32,128], index: 7, kind: input, shape index: {}]
  %s8 = inlined_call_operand.vmem [shape: f32[32,128], index: 8, kind: input, shape index: {}]
  %s9 = inlined_call_operand.vmem [shape: f32[1,128], index: 9, kind: input, shape index: {}]
  %s10 = inlined_call_operand.vmem [shape: f32[1,128], index: 10, kind: input, shape index: {}]
  %s11 = inlined_call_operand.vmem [shape: f32[1,128], index: 11, kind: input, shape index: {}]
  %s12 = inlined_call_operand.hbm [shape: f32[16,128], index: 12, kind: output, shape index: {}]
  %s13 = sld [smem:[#allocation0]]
  $region81: #{tpu_custom_call.1} parent=0
    _
  %s15 = ssub.s32 1, %s13
  %s16 = scalar_select 0, %s15, %s13
  %17 = sst [smem:[#allocation2]] %s0
  $region1: #{tpu_custom_call.1} parent=0
    #allocation3 [shape = 'u8[8192]{0}', space=vmem, size = 0x2000, scoped, tag = 'output window, operand 0']
    #allocation4 [shape = 's32[2]{0}', space=sflag, size = 0x8, scoped, tag = 'scoped memory for tpu_custom_call.1']
    %18 = vsyncpa [#allocation4], 0
    %s19 = scalar_lea.sflag [#allocation4], 1
    %20 = vsyncpa %s19, 0
    loop: start=0, step=1, limit=4
    $region2: #{tpu_custom_call.1} parent=1 // loop_pre_header
      _
    $region3: #{tpu_custom_call.1} parent=1 // loop_header
      %s22 = sphi 0, %s26
      %p23 = scmp.ge.s32.totalorder %s22, 4
      %s30 = sphi 0, %s30
      %s32 = sphi 0, %s30
      %s33 = sphi 0, %s32
      %s47 = sphi 0, %s33
      %s53 = sphi 0, %s55
      %s56 = sphi 0, %s53
      %s57 = sphi 0, %s56
      %s73 = sphi 0, %s57
      %s79 = sphi 0, %s81
      %s82 = sphi 0, %s79
      %s83 = sphi 0, %s82
      %s99 = sphi 0, %s83
      %s103 = sphi 0, %s103
      %s105 = sphi 0, %s103
      %s106 = sphi 0, %s105
      %s120 = sphi 0, %s106
      %s124 = sphi 0, %s124
      %s126 = sphi 0, %s124
      %s127 = sphi 0, %s126
      %s141 = sphi 0, %s127
      %s145 = sphi 0, %s145
      %s147 = sphi 0, %s145
      %s148 = sphi 0, %s147
      %s162 = sphi 0, %s148
      %s166 = sphi 0, %s166
      %s168 = sphi 0, %s166
      %s169 = sphi 0, %s168
      %s183 = sphi 0, %s169
      %s187 = sphi 0, %s187
      %s189 = sphi 0, %s187
      %s190 = sphi 0, %s189
      %s204 = sphi 0, %s190
      %s208 = sphi 0, %s208
      %s210 = sphi 0, %s208
      %s211 = sphi 0, %s210
      %s225 = sphi 0, %s211
      %s229 = sphi 0, %s229
      %s231 = sphi 0, %s229
      %s232 = sphi 0, %s231
      %s246 = sphi 0, %s232
      %s250 = sphi 0, %s250
      %s252 = sphi 0, %s250
      %s253 = sphi 0, %s252
      %s267 = sphi 0, %s253
      %s271 = sphi 0, %s271
      %s273 = sphi 0, %s271
      %s274 = sphi 0, %s273
      %s288 = sphi 0, %s274
      %s294 = sphi 0, %s296
      %s297 = sphi 0, %s294
      %s298 = sphi 0, %s297
      %s314 = sphi 0, %s298
    $region4: #{tpu_custom_call.1} parent=1 // loop_header_branch
      %25 = sbr.rel (%p23) target = $region8
    $region5: #{tpu_custom_call.1} parent=1 // loop_body
      %s27 = ssub.s32 %s22, 1
      %s28 = ssub.s32 %s22, 2
      %s29 = sadd.s32 %s22, 1
      %s31 = sadd.s32 %s30, 1
      %p34 = scmp.eq.s32.totalorder %s22, 1
      %p35 = scmp.ne.s32.totalorder %s30, %s32
      %p36 = scmp.eq.s32.totalorder %s22, 0
      %p37 = por %p35, %p36
      %p38 = scmp.ne.s32.totalorder %s30, %s32
      %p39 = scmp.eq.s32.totalorder %s27, 1
      %p40 = por %p38, %p39
      %p41 = scmp.ne.s32.totalorder %s32, %s33
      %p42 = scmp.eq.s32.totalorder %s27, 0
      %p43 = por %p41, %p42
      %p44 = scmp.ne.s32.totalorder %s32, %s33
      %p45 = scmp.eq.s32.totalorder %s28, 1
      %p46 = por %p44, %p45
      %p48 = scmp.ne.s32.totalorder %s33, %s47
      %p49 = scmp.eq.s32.totalorder %s28, 0
      %p50 = por %p48, %p49
      %s51 = ssub.s32 %s22, %s29
      %p52 = scmp.eq.s32.totalorder %s51, 0
      %s54 = sadd.s32 %s53, 1
      %s55 = scalar_select %p52, %s53, %s54
      %p58 = pneg %p52
      %p59 = scmp.eq.s32.totalorder %s22, 1
      %p60 = por %p58, %p59
      %p61 = scmp.ne.s32.totalorder %s53, %s56
      %p62 = scmp.eq.s32.totalorder %s22, 0
      %p63 = por %p61, %p62
      %p64 = scmp.ne.s32.totalorder %s53, %s56
      %p65 = scmp.eq.s32.totalorder %s27, 1
      %p66 = por %p64, %p65
      %p67 = scmp.ne.s32.totalorder %s56, %s57
      %p68 = scmp.eq.s32.totalorder %s27, 0
      %p69 = por %p67, %p68
      %p70 = scmp.ne.s32.totalorder %s56, %s57
      %p71 = scmp.eq.s32.totalorder %s28, 1
      %p72 = por %p70, %p71
      %p74 = scmp.ne.s32.totalorder %s57, %s73
      %p75 = scmp.eq.s32.totalorder %s28, 0
      %p76 = por %p74, %p75
      %s77 = ssub.s32 %s22, %s29
      %p78 = scmp.eq.s32.totalorder %s77, 0
      %s80 = sadd.s32 %s79, 1
      %s81 = scalar_select %p78, %s79, %s80
      %p84 = pneg %p78
      %p85 = scmp.eq.s32.totalorder %s22, 1
      %p86 = por %p84, %p85
      %p87 = scmp.ne.s32.totalorder %s79, %s82
      %p88 = scmp.eq.s32.totalorder %s22, 0
      %p89 = por %p87, %p88
      %p90 = scmp.ne.s32.totalorder %s79, %s82
      %p91 = scmp.eq.s32.totalorder %s27, 1
      %p92 = por %p90, %p91
      %p93 = scmp.ne.s32.totalorder %s82, %s83
      %p94 = scmp.eq.s32.totalorder %s27, 0
      %p95 = por %p93, %p94
      %p96 = scmp.ne.s32.totalorder %s82, %s83
      %p97 = scmp.eq.s32.totalorder %s28, 1
      %p98 = por %p96, %p97
      %p100 = scmp.ne.s32.totalorder %s83, %s99
      %p101 = scmp.eq.s32.totalorder %s28, 0
      %p102 = por %p100, %p101
      %s104 = sadd.s32 %s103, 1
      %p107 = scmp.eq.s32.totalorder %s22, 1
      %p108 = scmp.ne.s32.totalorder %s103, %s105
      %p109 = scmp.eq.s32.totalorder %s22, 0
      %p110 = por %p108, %p109
      %p111 = scmp.ne.s32.totalorder %s103, %s105
      %p112 = scmp.eq.s32.totalorder %s27, 1
      %p113 = por %p111, %p112
      %p114 = scmp.ne.s32.totalorder %s105, %s106
      %p115 = scmp.eq.s32.totalorder %s27, 0
      %p116 = por %p114, %p115
      %p117 = scmp.ne.s32.totalorder %s105, %s106
      %p118 = scmp.eq.s32.totalorder %s28, 1
      %p119 = por %p117, %p118
      %p121 = scmp.ne.s32.totalorder %s106, %s120
      %p122 = scmp.eq.s32.totalorder %s28, 0
      %p123 = por %p121, %p122
      %s125 = sadd.s32 %s124, 1
      %p128 = scmp.eq.s32.totalorder %s22, 1
      %p129 = scmp.ne.s32.totalorder %s124, %s126
      %p130 = scmp.eq.s32.totalorder %s22, 0
      %p131 = por %p129, %p130
      %p132 = scmp.ne.s32.totalorder %s124, %s126
      %p133 = scmp.eq.s32.totalorder %s27, 1
      %p134 = por %p132, %p133
      %p135 = scmp.ne.s32.totalorder %s126, %s127
      %p136 = scmp.eq.s32.totalorder %s27, 0
      %p137 = por %p135, %p136
      %p138 = scmp.ne.s32.totalorder %s126, %s127
      %p139 = scmp.eq.s32.totalorder %s28, 1
      %p140 = por %p138, %p139
      %p142 = scmp.ne.s32.totalorder %s127, %s141
      %p143 = scmp.eq.s32.totalorder %s28, 0
      %p144 = por %p142, %p143
      %s146 = sadd.s32 %s145, 1
      %p149 = scmp.eq.s32.totalorder %s22, 1
      %p150 = scmp.ne.s32.totalorder %s145, %s147
      %p151 = scmp.eq.s32.totalorder %s22, 0
      %p152 = por %p150, %p151
      %p153 = scmp.ne.s32.totalorder %s145, %s147
      %p154 = scmp.eq.s32.totalorder %s27, 1
      %p155 = por %p153, %p154
      %p156 = scmp.ne.s32.totalorder %s147, %s148
      %p157 = scmp.eq.s32.totalorder %s27, 0
      %p158 = por %p156, %p157
      %p159 = scmp.ne.s32.totalorder %s147, %s148
      %p160 = scmp.eq.s32.totalorder %s28, 1
      %p161 = por %p159, %p160
      %p163 = scmp.ne.s32.totalorder %s148, %s162
      %p164 = scmp.eq.s32.totalorder %s28, 0
      %p165 = por %p163, %p164
      %s167 = sadd.s32 %s166, 1
      %p170 = scmp.eq.s32.totalorder %s22, 1
      %p171 = scmp.ne.s32.totalorder %s166, %s168
      %p172 = scmp.eq.s32.totalorder %s22, 0
      %p173 = por %p171, %p172
      %p174 = scmp.ne.s32.totalorder %s166, %s168
      %p175 = scmp.eq.s32.totalorder %s27, 1
      %p176 = por %p174, %p175
      %p177 = scmp.ne.s32.totalorder %s168, %s169
      %p178 = scmp.eq.s32.totalorder %s27, 0
      %p179 = por %p177, %p178
      %p180 = scmp.ne.s32.totalorder %s168, %s169
      %p181 = scmp.eq.s32.totalorder %s28, 1
      %p182 = por %p180, %p181
      %p184 = scmp.ne.s32.totalorder %s169, %s183
      %p185 = scmp.eq.s32.totalorder %s28, 0
      %p186 = por %p184, %p185
      %s188 = sadd.s32 %s187, 1
      %p191 = scmp.eq.s32.totalorder %s22, 1
      %p192 = scmp.ne.s32.totalorder %s187, %s189
      %p193 = scmp.eq.s32.totalorder %s22, 0
      %p194 = por %p192, %p193
      %p195 = scmp.ne.s32.totalorder %s187, %s189
      %p196 = scmp.eq.s32.totalorder %s27, 1
      %p197 = por %p195, %p196
      %p198 = scmp.ne.s32.totalorder %s189, %s190
      %p199 = scmp.eq.s32.totalorder %s27, 0
      %p200 = por %p198, %p199
      %p201 = scmp.ne.s32.totalorder %s189, %s190
      %p202 = scmp.eq.s32.totalorder %s28, 1
      %p203 = por %p201, %p202
      %p205 = scmp.ne.s32.totalorder %s190, %s204
      %p206 = scmp.eq.s32.totalorder %s28, 0
      %p207 = por %p205, %p206
      %s209 = sadd.s32 %s208, 1
      %p212 = scmp.eq.s32.totalorder %s22, 1
      %p213 = scmp.ne.s32.totalorder %s208, %s210
      %p214 = scmp.eq.s32.totalorder %s22, 0
      %p215 = por %p213, %p214
      %p216 = scmp.ne.s32.totalorder %s208, %s210
      %p217 = scmp.eq.s32.totalorder %s27, 1
      %p218 = por %p216, %p217
      %p219 = scmp.ne.s32.totalorder %s210, %s211
      %p220 = scmp.eq.s32.totalorder %s27, 0
      %p221 = por %p219, %p220
      %p222 = scmp.ne.s32.totalorder %s210, %s211
      %p223 = scmp.eq.s32.totalorder %s28, 1
      %p224 = por %p222, %p223
      %p226 = scmp.ne.s32.totalorder %s211, %s225
      %p227 = scmp.eq.s32.totalorder %s28, 0
      %p228 = por %p226, %p227
      %s230 = sadd.s32 %s229, 1
      %p233 = scmp.eq.s32.totalorder %s22, 1
      %p234 = scmp.ne.s32.totalorder %s229, %s231
      %p235 = scmp.eq.s32.totalorder %s22, 0
      %p236 = por %p234, %p235
      %p237 = scmp.ne.s32.totalorder %s229, %s231
      %p238 = scmp.eq.s32.totalorder %s27, 1
      %p239 = por %p237, %p238
      %p240 = scmp.ne.s32.totalorder %s231, %s232
      %p241 = scmp.eq.s32.totalorder %s27, 0
      %p242 = por %p240, %p241
      %p243 = scmp.ne.s32.totalorder %s231, %s232
      %p244 = scmp.eq.s32.totalorder %s28, 1
      %p245 = por %p243, %p244
      %p247 = scmp.ne.s32.totalorder %s232, %s246
      %p248 = scmp.eq.s32.totalorder %s28, 0
      %p249 = por %p247, %p248
      %s251 = sadd.s32 %s250, 1
      %p254 = scmp.eq.s32.totalorder %s22, 1
      %p255 = scmp.ne.s32.totalorder %s250, %s252
      %p256 = scmp.eq.s32.totalorder %s22, 0
      %p257 = por %p255, %p256
      %p258 = scmp.ne.s32.totalorder %s250, %s252
      %p259 = scmp.eq.s32.totalorder %s27, 1
      %p260 = por %p258, %p259
      %p261 = scmp.ne.s32.totalorder %s252, %s253
      %p262 = scmp.eq.s32.totalorder %s27, 0
      %p263 = por %p261, %p262
      %p264 = scmp.ne.s32.totalorder %s252, %s253
      %p265 = scmp.eq.s32.totalorder %s28, 1
      %p266 = por %p264, %p265
      %p268 = scmp.ne.s32.totalorder %s253, %s267
      %p269 = scmp.eq.s32.totalorder %s28, 0
      %p270 = por %p268, %p269
      %s272 = sadd.s32 %s271, 1
      %p275 = scmp.eq.s32.totalorder %s22, 1
      %p276 = scmp.ne.s32.totalorder %s271, %s273
      %p277 = scmp.eq.s32.totalorder %s22, 0
      %p278 = por %p276, %p277
      %p279 = scmp.ne.s32.totalorder %s271, %s273
      %p280 = scmp.eq.s32.totalorder %s27, 1
      %p281 = por %p279, %p280
      %p282 = scmp.ne.s32.totalorder %s273, %s274
      %p283 = scmp.eq.s32.totalorder %s27, 0
      %p284 = por %p282, %p283
      %p285 = scmp.ne.s32.totalorder %s273, %s274
      %p286 = scmp.eq.s32.totalorder %s28, 1
      %p287 = por %p285, %p286
      %p289 = scmp.ne.s32.totalorder %s274, %s288
      %p290 = scmp.eq.s32.totalorder %s28, 0
      %p291 = por %p289, %p290
      %s292 = ssub.s32 %s22, %s29
      %p293 = scmp.eq.s32.totalorder %s292, 0
      %s295 = sadd.s32 %s294, 1
      %s296 = scalar_select %p293, %s294, %s295
      %p299 = pneg %p293
      %p300 = scmp.eq.s32.totalorder %s22, 1
      %p301 = por %p299, %p300
      %p302 = scmp.ne.s32.totalorder %s294, %s297
      %p303 = scmp.eq.s32.totalorder %s22, 0
      %p304 = por %p302, %p303
      %p305 = scmp.ne.s32.totalorder %s294, %s297
      %p306 = scmp.eq.s32.totalorder %s27, 1
      %p307 = por %p305, %p306
      %p308 = scmp.ne.s32.totalorder %s297, %s298
      %p309 = scmp.eq.s32.totalorder %s27, 0
      %p310 = por %p308, %p309
      %p311 = scmp.ne.s32.totalorder %s297, %s298
      %p312 = scmp.eq.s32.totalorder %s28, 1
      %p313 = por %p311, %p312
      %p315 = scmp.ne.s32.totalorder %s298, %s314
      %p316 = scmp.eq.s32.totalorder %s28, 0
      %p317 = por %p315, %p316
      %p318 = scmp.le.s32.totalorder 1, %s22
      %p319 = scmp.lt.s32.totalorder %s22, 3
      %p320 = pnand %p318, %p319
      %p321 = pneg %p320
      // Predicated region
      $region9: #{tpu_custom_call.1} parent=5 // pred_check
        _
      $region10: #{tpu_custom_call.1} parent=5 // pred_check_branch
        %323 = sbr.rel (%p320) target = $region12
      $region11: #{tpu_custom_call.1} parent=5 // pred_region
        %s324 = ssub.s32 %s22, 1
        // Predicated region
        $region13: #{tpu_custom_call.1} parent=11 // pred_check
          %p325 = pneg %p43
        $region14: #{tpu_custom_call.1} parent=11 // pred_check_branch
          %327 = sbr.rel (%p325) target = $region16
        $region15: #{tpu_custom_call.1} parent=11 // pred_region
          _
        $region16: #{tpu_custom_call.1} parent=11 // pred_fallthru
          _
        // Predicated region
        $region17: #{tpu_custom_call.1} parent=11 // pred_check
          %p328 = pneg %p116
        $region18: #{tpu_custom_call.1} parent=11 // pred_check_branch
          %330 = sbr.rel (%p328) target = $region20
        $region19: #{tpu_custom_call.1} parent=11 // pred_region
          _
        $region20: #{tpu_custom_call.1} parent=11 // pred_fallthru
          _
        // Predicated region
        $region21: #{tpu_custom_call.1} parent=11 // pred_check
          %p331 = pneg %p137
        $region22: #{tpu_custom_call.1} parent=11 // pred_check_branch
          %333 = sbr.rel (%p331) target = $region24
        $region23: #{tpu_custom_call.1} parent=11 // pred_region
          _
        $region24: #{tpu_custom_call.1} parent=11 // pred_fallthru
          _
        // Predicated region
        $region25: #{tpu_custom_call.1} parent=11 // pred_check
          %p334 = pneg %p158
        $region26: #{tpu_custom_call.1} parent=11 // pred_check_branch
          %336 = sbr.rel (%p334) target = $region28
        $region27: #{tpu_custom_call.1} parent=11 // pred_region
          _
        $region28: #{tpu_custom_call.1} parent=11 // pred_fallthru
          _
        // Predicated region
        $region29: #{tpu_custom_call.1} parent=11 // pred_check
          %p337 = pneg %p179
        $region30: #{tpu_custom_call.1} parent=11 // pred_check_branch
          %339 = sbr.rel (%p337) target = $region32
        $region31: #{tpu_custom_call.1} parent=11 // pred_region
          _
        $region32: #{tpu_custom_call.1} parent=11 // pred_fallthru
          _
        // Predicated region
        $region33: #{tpu_custom_call.1} parent=11 // pred_check
          %p340 = pneg %p200
        $region34: #{tpu_custom_call.1} parent=11 // pred_check_branch
          %342 = sbr.rel (%p340) target = $region36
        $region35: #{tpu_custom_call.1} parent=11 // pred_region
          _
        $region36: #{tpu_custom_call.1} parent=11 // pred_fallthru
          _
        // Predicated region
        $region37: #{tpu_custom_call.1} parent=11 // pred_check
          %p343 = pneg %p221
        $region38: #{tpu_custom_call.1} parent=11 // pred_check_branch
          %345 = sbr.rel (%p343) target = $region40
        $region39: #{tpu_custom_call.1} parent=11 // pred_region
          _
        $region40: #{tpu_custom_call.1} parent=11 // pred_fallthru
          _
        // Predicated region
        $region41: #{tpu_custom_call.1} parent=11 // pred_check
          %p346 = pneg %p242
        $region42: #{tpu_custom_call.1} parent=11 // pred_check_branch
          %348 = sbr.rel (%p346) target = $region44
        $region43: #{tpu_custom_call.1} parent=11 // pred_region
          _
        $region44: #{tpu_custom_call.1} parent=11 // pred_fallthru
          _
        // Predicated region
        $region45: #{tpu_custom_call.1} parent=11 // pred_check
          %p349 = pneg %p263
        $region46: #{tpu_custom_call.1} parent=11 // pred_check_branch
          %351 = sbr.rel (%p349) target = $region48
        $region47: #{tpu_custom_call.1} parent=11 // pred_region
          _
        $region48: #{tpu_custom_call.1} parent=11 // pred_fallthru
          _
        // Predicated region
        $region49: #{tpu_custom_call.1} parent=11 // pred_check
          %p352 = pneg %p284
        $region50: #{tpu_custom_call.1} parent=11 // pred_check_branch
          %354 = sbr.rel (%p352) target = $region52
        $region51: #{tpu_custom_call.1} parent=11 // pred_region
          _
        $region52: #{tpu_custom_call.1} parent=11 // pred_fallthru
          _
      $region12: #{tpu_custom_call.1} parent=5 // pred_fallthru
        _
      %p355 = scmp.lt.s32.totalorder %s22, 2
      // Predicated region
      $region53: #{tpu_custom_call.1} parent=5 // pred_check
        %p356 = pneg %p355
      $region54: #{tpu_custom_call.1} parent=5 // pred_check_branch
        %358 = sbr.rel (%p356) target = $region56
      $region55: #{tpu_custom_call.1} parent=5 // pred_region
        // Predicated region
        $region57: #{tpu_custom_call.1} parent=55 // pred_check
          %p359 = pneg %p63
        $region58: #{tpu_custom_call.1} parent=55 // pred_check_branch
          %361 = sbr.rel (%p359) target = $region60
        $region59: #{tpu_custom_call.1} parent=55 // pred_region
          %p362 = scmp.lt.s32.totalorder %s22, 1
          %s363 = scalar_select %p362, %s22, 1
          %s364 = smul.addr %s363, 8
          %s365 = scalar_lea.vmem %s1, %s364
        $region60: #{tpu_custom_call.1} parent=55 // pred_fallthru
          _
        // Predicated region
        $region61: #{tpu_custom_call.1} parent=55 // pred_check
          %p366 = pneg %p89
        $region62: #{tpu_custom_call.1} parent=55 // pred_check_branch
          %368 = sbr.rel (%p366) target = $region64
        $region63: #{tpu_custom_call.1} parent=55 // pred_region
          %s369 = smul.u32 8, %s22
          %p370 = scmp.lt.s32.totalorder %s369, 15
          %s371 = scalar_select %p370, %s369, 15
          %s372 = smul.addr %s371, 8
          %s373 = scalar_lea.vmem %s2, %s372
          %s374 = smul.u32 8, %s22
        $region64: #{tpu_custom_call.1} parent=55 // pred_fallthru
          _
      $region56: #{tpu_custom_call.1} parent=5 // pred_fallthru
        _
      %p375 = scmp.le.s32.totalorder 1, %s22
      %p376 = scmp.lt.s32.totalorder %s22, 3
      %p377 = pnand %p375, %p376
      %p378 = pneg %p377
      // Predicated region
      $region65: #{tpu_custom_call.1} parent=5 // pred_check
        _
      $region66: #{tpu_custom_call.1} parent=5 // pred_check_branch
        %380 = sbr.rel (%p377) target = $region68
      $region67: #{tpu_custom_call.1} parent=5 // pred_region
        %s381 = ssub.s32 %s22, 1
        %p382 = pneg %p43
        %p383 = pneg %p40
        %p384 = scmp.lt.s32.totalorder %s27, 1
        %s385 = scalar_select %p384, %s27, 1
        %s386 = smul.addr %s385, 8
        %s387 = scalar_lea.vmem %s1, %s386
        %p388 = pneg %p69
        %p389 = pneg %p66
        %s390 = smul.u32 8, %s27
        %p391 = scmp.lt.s32.totalorder %s390, 15
        %s392 = scalar_select %p391, %s390, 15
        %s393 = smul.addr %s392, 8
        %s394 = scalar_lea.vmem %s2, %s393
        %p395 = pneg %p95
        %p396 = pneg %p92
        %p397 = pneg %p116
        %p398 = pneg %p113
        %p399 = pneg %p137
        %p400 = pneg %p134
        %p401 = pneg %p158
        %p402 = pneg %p155
        %p403 = pneg %p179
        %p404 = pneg %p176
        %p405 = pneg %p200
        %p406 = pneg %p197
        %p407 = pneg %p221
        %p408 = pneg %p218
        %p409 = pneg %p242
        %p410 = pneg %p239
        %p411 = pneg %p263
        %p412 = pneg %p260
        %p413 = pneg %p284
        %p414 = pneg %p281
        %p415 = pneg %p310
        %p416 = pneg %p307
        %s417 = sand.u32 %s297, 1
        %s418 = scalar_lea.sflag [#allocation4], %s417
        %s419 = sand.u32 %s297, 1
        %s420 = smul.addr %s419, 8
        %s421 = scalar_lea.vmem [#allocation3], %s420
        %p422 = scmp.lt.s32.totalorder %s27, 1
        %s423 = scalar_select %p422, %s27, 1
        %s424 = smul.addr %s423, 8
        %s425 = scalar_lea.vmem %s1, %s424
        %s426 = smul.u32 8, %s27
        %p427 = scmp.lt.s32.totalorder %s426, 15
        %s428 = scalar_select %p427, %s426, 15
        %s429 = smul.addr %s428, 8
        %s430 = scalar_lea.vmem %s2, %s429
        %s431 = smul.u32 8, %s27
        %v432 = vld [vmem:[%s425] sm:$0xff]
        %v433 = vld [vmem:[%s430] sm:$0xff]
        %v434 = vld [vmem:[%s430 + $0x8] sm:$0xff]
        %v435 = vld [vmem:[%s430 + $0x10] sm:$0xff]
        %v436 = vld [vmem:[%s430 + $0x18] sm:$0xff]
        %v437 = vld [vmem:[%s430 + $0x20] sm:$0xff]
        %v438 = vld [vmem:[%s430 + $0x28] sm:$0xff]
        %v439 = vld [vmem:[%s430 + $0x30] sm:$0xff]
        %v440 = vld [vmem:[%s430 + $0x38] sm:$0xff]
        %v441 = vld [vmem:[%s3] sm:$0xff]
        %v442 = vld [vmem:[%s3 + $0x8] sm:$0xff]
        %v443 = vld [vmem:[%s3 + $0x10] sm:$0xff]
        %v444 = vld [vmem:[%s3 + $0x18] sm:$0xff]
        %v445 = vld [vmem:[%s4] sm:$0x1]
        %v447 = vlaneseq
        %v448 = vshrl.u32 %v447, 7
        %v449 = vsub.s32 0, %v448
        %v450 = vrot.slane %v445, %v449
        %vm452 = vcmask 261120
        %v454 = vsel %vm452, %v432, 0
        %456 = vmatprep.subr.mxu0 0.0
        %457 = vmatpush1.msra.mxu0 0.0
        %458 = vmatprep.subr.mxu0 0.0
        %459 = vmatpush1.msra.mxu0 0.0
        %460 = vmatprep.subr.mxu0 0.0
        %461 = vmatpush1.msra.mxu0 0.0
        %462 = vmatprep.subr.mxu0 0.0
        %463 = vmatpush1.msra.mxu0 0.0
        %464 = vmatprep.subr.mxu0 0.0
        %465 = vmatpush1.msra.mxu0 0.0
        %466 = vmatprep.subr.mxu0 0.0
        %467 = vmatpush1.msra.mxu0 0.0
        %468 = vmatprep.subr.mxu0 0.0
        %469 = vmatpush1.msra.mxu0 0.0
        %470 = vmatprep.subr.mxu0 0.0
        %471 = vmatpush1.msra.mxu0 0.0
        %472 = vmatprep.subr.mxu0 0.0
        %473 = vmatpush1.msra.mxu0 0.0
        %474 = vmatprep.subr.mxu0 0.0
        %475 = vmatpush1.msra.mxu0 0.0
        %476 = vmatprep.subr.mxu0 0.0
        %477 = vmatpush1.msra.mxu0 0.0
        %478 = vmatprep.subr.mxu0 0.0
        %479 = vmatpush1.msra.mxu0 0.0
        %480 = vmatprep.subr.mxu0 0.0
        %481 = vmatpush1.msra.mxu0 %v444
        %482 = vmatprep.subr.mxu0 0.0
        %483 = vmatpush1.msra.mxu0 %v443
        %484 = vmatprep.subr.mxu0 0.0
        %485 = vmatpush1.msra.mxu0 %v442
        %486 = vmatprep.subr.mxu0 0.0
        %487 = vmatpush1.msra.mxu0 %v441
        %488 = vmatprep.subr.mxu0 0.0
        %489 = vmatpush2.msra.mxu0 0.0
        %490 = vmatprep.subr.mxu0 0.0
        %491 = vmatpush2.msra.mxu0 0.0
        %492 = vmatprep.subr.mxu0 0.0
        %493 = vmatpush2.msra.mxu0 0.0
        %494 = vmatprep.subr.mxu0 0.0
        %495 = vmatpush2.msra.mxu0 0.0
        %496 = vmatprep.subr.mxu0 0.0
        %497 = vmatpush2.msra.mxu0 0.0
        %498 = vmatprep.subr.mxu0 0.0
        %499 = vmatpush2.msra.mxu0 0.0
        %500 = vmatprep.subr.mxu0 0.0
        %501 = vmatpush2.msra.mxu0 0.0
        %502 = vmatprep.subr.mxu0 0.0
        %503 = vmatpush2.msra.mxu0 0.0
        %504 = vmatprep.subr.mxu0 0.0
        %505 = vmatpush2.msra.mxu0 0.0
        %506 = vmatprep.subr.mxu0 0.0
        %507 = vmatpush2.msra.mxu0 0.0
        %508 = vmatprep.subr.mxu0 0.0
        %509 = vmatpush2.msra.mxu0 0.0
        %510 = vmatprep.subr.mxu0 0.0
        %511 = vmatpush2.msra.mxu0 0.0
        %512 = vmatprep.subr.mxu0 0.0
        %513 = vmatpush2.msra.mxu0 0.0
        %514 = vmatprep.subr.mxu0 0.0
        %515 = vmatpush2.msra.mxu0 0.0
        %516 = vmatprep.subr.mxu0 0.0
        %517 = vmatpush2.msra.mxu0 0.0
        %518 = vmatprep.subr.mxu0 0.0
        %519 = vmatpush2.msra.mxu0 0.0
        %520 = vmatprep.mubr.f32.mxu0 0.0
        %521 = vmatmul.mubr.f32.gmra.mxu0 %v454
        %v522 = vpop.f32.mrf.mxu0
        %v523 = vadd.f32 %v450, %v522
        %v524 = vpop.f32.mrf.mxu0
        %525 = vdwg.mxu0
        %v526 = vld [vmem:[%s5] sm:$0xff]
        %v527 = vld [vmem:[%s5 + $0x8] sm:$0xff]
        %v528 = vld [vmem:[%s5 + $0x10] sm:$0xff]
        %v529 = vld [vmem:[%s5 + $0x18] sm:$0xff]
        %v530 = vld [vmem:[%s5 + $0x20] sm:$0xff]
        %v531 = vld [vmem:[%s5 + $0x28] sm:$0xff]
        %v532 = vld [vmem:[%s5 + $0x30] sm:$0xff]
        %v533 = vld [vmem:[%s5 + $0x38] sm:$0xff]
        %v534 = vld [vmem:[%s6] sm:$0x1]
        %v536 = vlaneseq
        %v537 = vshrl.u32 %v536, 7
        %v538 = vsub.s32 0, %v537
        %v539 = vrot.slane %v534, %v538
        %vm541 = vcmask 523264
        %v543 = vsel %vm541, %v433, 0
        %v546 = vsel %vm541, %v434, 0
        %v549 = vsel %vm541, %v435, 0
        %v552 = vsel %vm541, %v436, 0
        %v555 = vsel %vm541, %v437, 0
        %v558 = vsel %vm541, %v438, 0
        %v561 = vsel %vm541, %v439, 0
        %v564 = vsel %vm541, %v440, 0
        %566 = vmatprep.subr.mxu0 0.0
        %567 = vmatpush1.msra.mxu0 0.0
        %568 = vmatprep.subr.mxu0 0.0
        %569 = vmatpush1.msra.mxu0 0.0
        %570 = vmatprep.subr.mxu0 0.0
        %571 = vmatpush1.msra.mxu0 0.0
        %572 = vmatprep.subr.mxu0 0.0
        %573 = vmatpush1.msra.mxu0 0.0
        %574 = vmatprep.subr.mxu0 0.0
        %575 = vmatpush1.msra.mxu0 0.0
        %576 = vmatprep.subr.mxu0 0.0
        %577 = vmatpush1.msra.mxu0 0.0
        %578 = vmatprep.subr.mxu0 0.0
        %579 = vmatpush1.msra.mxu0 0.0
        %580 = vmatprep.subr.mxu0 0.0
        %581 = vmatpush1.msra.mxu0 0.0
        %582 = vmatprep.subr.mxu0 0.0
        %583 = vmatpush1.msra.mxu0 %v533
        %584 = vmatprep.subr.mxu0 0.0
        %585 = vmatpush1.msra.mxu0 %v532
        %586 = vmatprep.subr.mxu0 0.0
        %587 = vmatpush1.msra.mxu0 %v531
        %588 = vmatprep.subr.mxu0 0.0
        %589 = vmatpush1.msra.mxu0 %v530
        %590 = vmatprep.subr.mxu0 0.0
        %591 = vmatpush1.msra.mxu0 %v529
        %592 = vmatprep.subr.mxu0 0.0
        %593 = vmatpush1.msra.mxu0 %v528
        %594 = vmatprep.subr.mxu0 0.0
        %595 = vmatpush1.msra.mxu0 %v527
        %596 = vmatprep.subr.mxu0 0.0
        %597 = vmatpush1.msra.mxu0 %v526
        %598 = vmatprep.subr.mxu0 0.0
        %599 = vmatpush2.msra.mxu0 0.0
        %600 = vmatprep.subr.mxu0 0.0
        %601 = vmatpush2.msra.mxu0 0.0
        %602 = vmatprep.subr.mxu0 0.0
        %603 = vmatpush2.msra.mxu0 0.0
        %604 = vmatprep.subr.mxu0 0.0
        %605 = vmatpush2.msra.mxu0 0.0
        %606 = vmatprep.subr.mxu0 0.0
        %607 = vmatpush2.msra.mxu0 0.0
        %608 = vmatprep.subr.mxu0 0.0
        %609 = vmatpush2.msra.mxu0 0.0
        %610 = vmatprep.subr.mxu0 0.0
        %611 = vmatpush2.msra.mxu0 0.0
        %612 = vmatprep.subr.mxu0 0.0
        %613 = vmatpush2.msra.mxu0 0.0
        %614 = vmatprep.subr.mxu0 0.0
        %615 = vmatpush2.msra.mxu0 0.0
        %616 = vmatprep.subr.mxu0 0.0
        %617 = vmatpush2.msra.mxu0 0.0
        %618 = vmatprep.subr.mxu0 0.0
        %619 = vmatpush2.msra.mxu0 0.0
        %620 = vmatprep.subr.mxu0 0.0
        %621 = vmatpush2.msra.mxu0 0.0
        %622 = vmatprep.subr.mxu0 0.0
        %623 = vmatpush2.msra.mxu0 0.0
        %624 = vmatprep.subr.mxu0 0.0
        %625 = vmatpush2.msra.mxu0 0.0
        %626 = vmatprep.subr.mxu0 0.0
        %627 = vmatpush2.msra.mxu0 0.0
        %628 = vmatprep.subr.mxu0 0.0
        %629 = vmatpush2.msra.mxu0 0.0
        %630 = vmatprep.mubr.f32.mxu0 0.0
        %631 = vmatmul.mubr.f32.gmra.mxu0 %v543
        %v632 = vpop.f32.mrf.mxu0
        %v633 = vadd.f32 %v539, %v632
        %v634 = vpop.f32.mrf.mxu0
        %635 = vmatprep.mubr.f32.mxu0 0.0
        %636 = vmatmul.mubr.f32.gmra.mxu0 %v546
        %v637 = vpop.f32.mrf.mxu0
        %v638 = vadd.f32 %v539, %v637
        %v639 = vpop.f32.mrf.mxu0
        %640 = vmatprep.mubr.f32.mxu0 0.0
        %641 = vmatmul.mubr.f32.gmra.mxu0 %v549
        %v642 = vpop.f32.mrf.mxu0
        %v643 = vadd.f32 %v539, %v642
        %v644 = vpop.f32.mrf.mxu0
        %645 = vmatprep.mubr.f32.mxu0 0.0
        %646 = vmatmul.mubr.f32.gmra.mxu0 %v552
        %v647 = vpop.f32.mrf.mxu0
        %v648 = vadd.f32 %v539, %v647
        %v649 = vpop.f32.mrf.mxu0
        %650 = vmatprep.mubr.f32.mxu0 0.0
        %651 = vmatmul.mubr.f32.gmra.mxu0 %v555
        %v652 = vpop.f32.mrf.mxu0
        %v653 = vadd.f32 %v539, %v652
        %v654 = vpop.f32.mrf.mxu0
        %655 = vmatprep.mubr.f32.mxu0 0.0
        %656 = vmatmul.mubr.f32.gmra.mxu0 %v558
        %v657 = vpop.f32.mrf.mxu0
        %v658 = vadd.f32 %v539, %v657
        %v659 = vpop.f32.mrf.mxu0
        %660 = vmatprep.mubr.f32.mxu0 0.0
        %661 = vmatmul.mubr.f32.gmra.mxu0 %v561
        %v662 = vpop.f32.mrf.mxu0
        %v663 = vadd.f32 %v539, %v662
        %v664 = vpop.f32.mrf.mxu0
        %665 = vmatprep.mubr.f32.mxu0 0.0
        %666 = vmatmul.mubr.f32.gmra.mxu0 %v564
        %v667 = vpop.f32.mrf.mxu0
        %v668 = vadd.f32 %v539, %v667
        %v669 = vpop.f32.mrf.mxu0
        %670 = vdwg.mxu0
        %s671 = sld [smem:[#allocation2]]
        %v673 = vcombine.high %v523, %v523
        %v675 = vunpack.c.l.s4 1966171168
        %v676 = vunpack.c.0.s8 %v675
        %v677 = vlaneseq
        %v678 = vshrl.u32 %v677, 7
        %v679 = vsub.s32 %v676, %v678
        %v680 = vrot.slane %v523, %v679
        %v682 = vunpack.c.l.s4 1966171168
        %v683 = vunpack.c.0.s8 %v682
        %v684 = vlaneseq
        %v685 = vshrl.u32 %v684, 7
        %v686 = vsub.s32 %v683, %v685
        %v687 = vrot.slane %v673, %v686
        %v688 = vcombine.high %v680, %v680
        %v689 = vcombine.high %v687, %v687
        %v691 = vunpack.c.l.s4 1966171168
        %v692 = vunpack.c.0.s8 %v691
        %v693 = vlaneseq
        %v694 = vshrl.u32 %v693, 7
        %v695 = vsub.s32 %v692, %v694
        %v696 = vrot.slane %v680, %v695
        %v698 = vunpack.c.l.s4 1966171168
        %v699 = vunpack.c.0.s8 %v698
        %v700 = vlaneseq
        %v701 = vshrl.u32 %v700, 7
        %v702 = vsub.s32 %v699, %v701
        %v703 = vrot.slane %v687, %v702
        %v705 = vunpack.c.l.s4 1966171168
        %v706 = vunpack.c.0.s8 %v705
        %v707 = vlaneseq
        %v708 = vshrl.u32 %v707, 7
        %v709 = vsub.s32 %v706, %v708
        %v710 = vrot.slane %v688, %v709
        %v712 = vunpack.c.l.s4 1966171168
        %v713 = vunpack.c.0.s8 %v712
        %v714 = vlaneseq
        %v715 = vshrl.u32 %v714, 7
        %v716 = vsub.s32 %v713, %v715
        %v717 = vrot.slane %v689, %v716
        %v718 = vcombine.high %v696, %v696
        %v719 = vcombine.high %v703, %v703
        %v720 = vcombine.high %v710, %v710
        %v721 = vcombine.high %v717, %v717
        %v722 = vlaneseq
        %v723 = vshrl.u32 %v722, 7
        %v724 = vsub.s32 0, %v723
        %v725 = vrot.slane %v696, %v724
        %v726 = vlaneseq
        %v727 = vshrl.u32 %v726, 7
        %v728 = vsub.s32 0, %v727
        %v729 = vrot.slane %v710, %v728
        %v730 = vlaneseq
        %v731 = vshrl.u32 %v730, 7
        %v732 = vsub.s32 0, %v731
        %v733 = vrot.slane %v718, %v732
        %v734 = vlaneseq
        %v735 = vshrl.u32 %v734, 7
        %v736 = vsub.s32 0, %v735
        %v737 = vrot.slane %v720, %v736
        %v738 = vlaneseq
        %v739 = vshrl.u32 %v738, 7
        %v740 = vsub.s32 0, %v739
        %v741 = vrot.slane %v703, %v740
        %v742 = vlaneseq
        %v743 = vshrl.u32 %v742, 7
        %v744 = vsub.s32 0, %v743
        %v745 = vrot.slane %v717, %v744
        %v746 = vlaneseq
        %v747 = vshrl.u32 %v746, 7
        %v748 = vsub.s32 0, %v747
        %v749 = vrot.slane %v719, %v748
        %v750 = vlaneseq
        %v751 = vshrl.u32 %v750, 7
        %v752 = vsub.s32 0, %v751
        %v753 = vrot.slane %v721, %v752
        %v762 = vmul.f32 %v725, %v633
        %v763 = vmul.f32 %v729, %v638
        %v764 = vmul.f32 %v733, %v643
        %v765 = vmul.f32 %v737, %v648
        %v766 = vmul.f32 %v741, %v653
        %v767 = vmul.f32 %v745, %v658
        %v768 = vmul.f32 %v749, %v663
        %v769 = vmul.f32 %v753, %v668
        %v770 = vsel %vm452, %v762, 0.0
        %771 = vadd.xlane.f32.xlu0 %v770
        %v772 = vpop.xlane.xlu0 %771
        %v773 = vsel %vm452, %v763, 0.0
        %774 = vadd.xlane.f32.xlu0 %v773
        %v775 = vpop.xlane.xlu0 %774
        %v776 = vsel %vm452, %v764, 0.0
        %777 = vadd.xlane.f32.xlu0 %v776
        %v778 = vpop.xlane.xlu0 %777
        %v779 = vsel %vm452, %v765, 0.0
        %780 = vadd.xlane.f32.xlu0 %v779
        %v781 = vpop.xlane.xlu0 %780
        %v782 = vsel %vm452, %v766, 0.0
        %783 = vadd.xlane.f32.xlu0 %v782
        %v784 = vpop.xlane.xlu0 %783
        %v785 = vsel %vm452, %v767, 0.0
        %786 = vadd.xlane.f32.xlu0 %v785
        %v787 = vpop.xlane.xlu0 %786
        %v788 = vsel %vm452, %v768, 0.0
        %789 = vadd.xlane.f32.xlu0 %v788
        %v790 = vpop.xlane.xlu0 %789
        %v791 = vsel %vm452, %v769, 0.0
        %792 = vadd.xlane.f32.xlu0 %v791
        %v793 = vpop.xlane.xlu0 %792
        %v794 = vstv %s671
        %v795 = vadd.f32 %v772, %v794
        %v796 = vadd.f32 %v775, %v794
        %v797 = vadd.f32 %v778, %v794
        %v798 = vadd.f32 %v781, %v794
        %v799 = vadd.f32 %v784, %v794
        %v800 = vadd.f32 %v787, %v794
        %v801 = vadd.f32 %v790, %v794
        %v802 = vadd.f32 %v793, %v794
        %vm803 = vcmp.gt.f32.partialorder %v795, 0.0
        %vm804 = vcmp.gt.f32.partialorder %v796, 0.0
        %vm805 = vcmp.gt.f32.partialorder %v797, 0.0
        %vm806 = vcmp.gt.f32.partialorder %v798, 0.0
        %vm807 = vcmp.gt.f32.partialorder %v799, 0.0
        %vm808 = vcmp.gt.f32.partialorder %v800, 0.0
        %vm809 = vcmp.gt.f32.partialorder %v801, 0.0
        %vm810 = vcmp.gt.f32.partialorder %v802, 0.0
        %v811 = vmul.f32 %v795, 0.2
        %v812 = vmul.f32 %v796, 0.2
        %v813 = vmul.f32 %v797, 0.2
        %v814 = vmul.f32 %v798, 0.2
        %v815 = vmul.f32 %v799, 0.2
        %v816 = vmul.f32 %v800, 0.2
        %v817 = vmul.f32 %v801, 0.2
        %v818 = vmul.f32 %v802, 0.2
        %v819 = vsel %vm803, %v795, %v811
        %v820 = vsel %vm804, %v796, %v812
        %v821 = vsel %vm805, %v797, %v813
        %v822 = vsel %vm806, %v798, %v814
        %v823 = vsel %vm807, %v799, %v815
        %v824 = vsel %vm808, %v800, %v816
        %v825 = vsel %vm809, %v801, %v817
        %v826 = vsel %vm810, %v802, %v818
        %v827 = vrot.slane %v819, 4
        %v828 = vmax.f32 %v819, %v827
        %v829 = vrot.slane %v828, 2
        %v830 = vmax.f32 %v828, %v829
        %v831 = vrot.slane %v830, 1
        %v832 = vmax.f32 %v830, %v831
        %v833 = vrot.slane %v820, 4
        %v834 = vmax.f32 %v820, %v833
        %v835 = vrot.slane %v834, 2
        %v836 = vmax.f32 %v834, %v835
        %v837 = vrot.slane %v836, 1
        %v838 = vmax.f32 %v836, %v837
        %v839 = vrot.slane %v821, 4
        %v840 = vmax.f32 %v821, %v839
        %v841 = vrot.slane %v840, 2
        %v842 = vmax.f32 %v840, %v841
        %v843 = vrot.slane %v842, 1
        %v844 = vmax.f32 %v842, %v843
        %v845 = vrot.slane %v822, 4
        %v846 = vmax.f32 %v822, %v845
        %v847 = vrot.slane %v846, 2
        %v848 = vmax.f32 %v846, %v847
        %v849 = vrot.slane %v848, 1
        %v850 = vmax.f32 %v848, %v849
        %v851 = vrot.slane %v823, 4
        %v852 = vmax.f32 %v823, %v851
        %v853 = vrot.slane %v852, 2
        %v854 = vmax.f32 %v852, %v853
        %v855 = vrot.slane %v854, 1
        %v856 = vmax.f32 %v854, %v855
        %v857 = vrot.slane %v824, 4
        %v858 = vmax.f32 %v824, %v857
        %v859 = vrot.slane %v858, 2
        %v860 = vmax.f32 %v858, %v859
        %v861 = vrot.slane %v860, 1
        %v862 = vmax.f32 %v860, %v861
        %v863 = vrot.slane %v825, 4
        %v864 = vmax.f32 %v825, %v863
        %v865 = vrot.slane %v864, 2
        %v866 = vmax.f32 %v864, %v865
        %v867 = vrot.slane %v866, 1
        %v868 = vmax.f32 %v866, %v867
        %v869 = vrot.slane %v826, 4
        %v870 = vmax.f32 %v826, %v869
        %v871 = vrot.slane %v870, 2
        %v872 = vmax.f32 %v870, %v871
        %v873 = vrot.slane %v872, 1
        %v874 = vmax.f32 %v872, %v873
        %v875 = vsub.f32 %v819, %v832
        %v876 = vsub.f32 %v820, %v838
        %v877 = vsub.f32 %v821, %v844
        %v878 = vsub.f32 %v822, %v850
        %v879 = vsub.f32 %v823, %v856
        %v880 = vsub.f32 %v824, %v862
        %v881 = vsub.f32 %v825, %v868
        %v882 = vsub.f32 %v826, %v874
        %v883 = vmul.f32 %v875, 1.442695
        %v884 = vpow.pop %v883
        %v885 = vmul.f32 %v876, 1.442695
        %v886 = vpow.pop %v885
        %v887 = vmul.f32 %v877, 1.442695
        %v888 = vpow.pop %v887
        %v889 = vmul.f32 %v878, 1.442695
        %v890 = vpow.pop %v889
        %v891 = vmul.f32 %v879, 1.442695
        %v892 = vpow.pop %v891
        %v893 = vmul.f32 %v880, 1.442695
        %v894 = vpow.pop %v893
        %v895 = vmul.f32 %v881, 1.442695
        %v896 = vpow.pop %v895
        %v897 = vmul.f32 %v882, 1.442695
        %v898 = vpow.pop %v897
        %v899 = vrot.slane %v884, 4
        %v900 = vadd.f32 %v884, %v899
        %v901 = vrot.slane %v900, 2
        %v902 = vadd.f32 %v900, %v901
        %v903 = vrot.slane %v902, 1
        %v904 = vadd.f32 %v902, %v903
        %v905 = vrot.slane %v886, 4
        %v906 = vadd.f32 %v886, %v905
        %v907 = vrot.slane %v906, 2
        %v908 = vadd.f32 %v906, %v907
        %v909 = vrot.slane %v908, 1
        %v910 = vadd.f32 %v908, %v909
        %v911 = vrot.slane %v888, 4
        %v912 = vadd.f32 %v888, %v911
        %v913 = vrot.slane %v912, 2
        %v914 = vadd.f32 %v912, %v913
        %v915 = vrot.slane %v914, 1
        %v916 = vadd.f32 %v914, %v915
        %v917 = vrot.slane %v890, 4
        %v918 = vadd.f32 %v890, %v917
        %v919 = vrot.slane %v918, 2
        %v920 = vadd.f32 %v918, %v919
        %v921 = vrot.slane %v920, 1
        %v922 = vadd.f32 %v920, %v921
        %v923 = vrot.slane %v892, 4
        %v924 = vadd.f32 %v892, %v923
        %v925 = vrot.slane %v924, 2
        %v926 = vadd.f32 %v924, %v925
        %v927 = vrot.slane %v926, 1
        %v928 = vadd.f32 %v926, %v927
        %v929 = vrot.slane %v894, 4
        %v930 = vadd.f32 %v894, %v929
        %v931 = vrot.slane %v930, 2
        %v932 = vadd.f32 %v930, %v931
        %v933 = vrot.slane %v932, 1
        %v934 = vadd.f32 %v932, %v933
        %v935 = vrot.slane %v896, 4
        %v936 = vadd.f32 %v896, %v935
        %v937 = vrot.slane %v936, 2
        %v938 = vadd.f32 %v936, %v937
        %v939 = vrot.slane %v938, 1
        %v940 = vadd.f32 %v938, %v939
        %v941 = vrot.slane %v898, 4
        %v942 = vadd.f32 %v898, %v941
        %v943 = vrot.slane %v942, 2
        %v944 = vadd.f32 %v942, %v943
        %v945 = vrot.slane %v944, 1
        %v946 = vadd.f32 %v944, %v945
        %v947 = vrcp.pop %v904
        %v948 = vrcp.pop %v910
        %v949 = vrcp.pop %v916
        %v950 = vrcp.pop %v922
        %v951 = vrcp.pop %v928
        %v952 = vrcp.pop %v934
        %v953 = vrcp.pop %v940
        %v954 = vrcp.pop %v946
        %v955 = vmul.f32 %v884, %v947
        %v956 = vmul.f32 %v886, %v948
        %v957 = vmul.f32 %v888, %v949
        %v958 = vmul.f32 %v890, %v950
        %v959 = vmul.f32 %v892, %v951
        %v960 = vmul.f32 %v894, %v952
        %v961 = vmul.f32 %v896, %v953
        %v962 = vmul.f32 %v898, %v954
        %v963 = vmul.f32 %v633, %v955
        %v964 = vmul.f32 %v638, %v956
        %v965 = vmul.f32 %v643, %v957
        %v966 = vmul.f32 %v648, %v958
        %v967 = vmul.f32 %v653, %v959
        %v968 = vmul.f32 %v658, %v960
        %v969 = vmul.f32 %v663, %v961
        %v970 = vmul.f32 %v668, %v962
        %vm971 = vcmask 523520
        %v972 = vsel %vm971, %v963, 0.0
        %v973 = vrot.slane %v972, 4
        %v974 = vadd.f32 %v972, %v973
        %v975 = vrot.slane %v974, 2
        %v976 = vadd.f32 %v974, %v975
        %v977 = vrot.slane %v976, 1
        %v978 = vadd.f32 %v976, %v977
        %v979 = vsel %vm971, %v964, 0.0
        %v980 = vrot.slane %v979, 4
        %v981 = vadd.f32 %v979, %v980
        %v982 = vrot.slane %v981, 2
        %v983 = vadd.f32 %v981, %v982
        %v984 = vrot.slane %v983, 1
        %v985 = vadd.f32 %v983, %v984
        %v986 = vsel %vm971, %v965, 0.0
        %v987 = vrot.slane %v986, 4
        %v988 = vadd.f32 %v986, %v987
        %v989 = vrot.slane %v988, 2
        %v990 = vadd.f32 %v988, %v989
        %v991 = vrot.slane %v990, 1
        %v992 = vadd.f32 %v990, %v991
        %v993 = vsel %vm971, %v966, 0.0
        %v994 = vrot.slane %v993, 4
        %v995 = vadd.f32 %v993, %v994
        %v996 = vrot.slane %v995, 2
        %v997 = vadd.f32 %v995, %v996
        %v998 = vrot.slane %v997, 1
        %v999 = vadd.f32 %v997, %v998
        %v1000 = vsel %vm971, %v967, 0.0
        %v1001 = vrot.slane %v1000, 4
        %v1002 = vadd.f32 %v1000, %v1001
        %v1003 = vrot.slane %v1002, 2
        %v1004 = vadd.f32 %v1002, %v1003
        %v1005 = vrot.slane %v1004, 1
        %v1006 = vadd.f32 %v1004, %v1005
        %v1007 = vsel %vm971, %v968, 0.0
        %v1008 = vrot.slane %v1007, 4
        %v1009 = vadd.f32 %v1007, %v1008
        %v1010 = vrot.slane %v1009, 2
        %v1011 = vadd.f32 %v1009, %v1010
        %v1012 = vrot.slane %v1011, 1
        %v1013 = vadd.f32 %v1011, %v1012
        %v1014 = vsel %vm971, %v969, 0.0
        %v1015 = vrot.slane %v1014, 4
        %v1016 = vadd.f32 %v1014, %v1015
        %v1017 = vrot.slane %v1016, 2
        %v1018 = vadd.f32 %v1016, %v1017
        %v1019 = vrot.slane %v1018, 1
        %v1020 = vadd.f32 %v1018, %v1019
        %v1021 = vsel %vm971, %v970, 0.0
        %v1022 = vrot.slane %v1021, 4
        %v1023 = vadd.f32 %v1021, %v1022
        %v1024 = vrot.slane %v1023, 2
        %v1025 = vadd.f32 %v1023, %v1024
        %v1026 = vrot.slane %v1025, 1
        %v1027 = vadd.f32 %v1025, %v1026
        %v1028 = vld [vmem:[%s7] sm:$0xff]
        %v1029 = vld [vmem:[%s7 + $0x8] sm:$0xff]
        %v1030 = vld [vmem:[%s7 + $0x10] sm:$0xff]
        %v1031 = vld [vmem:[%s7 + $0x18] sm:$0xff]
        %v1032 = vld [vmem:[%s8] sm:$0xff]
        %v1033 = vld [vmem:[%s8 + $0x8] sm:$0xff]
        %v1034 = vld [vmem:[%s8 + $0x10] sm:$0xff]
        %v1035 = vld [vmem:[%s8 + $0x18] sm:$0xff]
        %1036 = vmatprep.subr.mxu0 0.0
        %1037 = vmatpush1.msra.mxu0 0.0
        %1038 = vmatprep.subr.mxu0 0.0
        %1039 = vmatpush1.msra.mxu0 0.0
        %1040 = vmatprep.subr.mxu0 0.0
        %1041 = vmatpush1.msra.mxu0 0.0
        %1042 = vmatprep.subr.mxu0 0.0
        %1043 = vmatpush1.msra.mxu0 0.0
        %1044 = vmatprep.subr.mxu0 0.0
        %1045 = vmatpush1.msra.mxu0 0.0
        %1046 = vmatprep.subr.mxu0 0.0
        %1047 = vmatpush1.msra.mxu0 0.0
        %1048 = vmatprep.subr.mxu0 0.0
        %1049 = vmatpush1.msra.mxu0 0.0
        %1050 = vmatprep.subr.mxu0 0.0
        %1051 = vmatpush1.msra.mxu0 0.0
        %1052 = vmatprep.subr.mxu0 0.0
        %1053 = vmatpush1.msra.mxu0 0.0
        %1054 = vmatprep.subr.mxu0 0.0
        %1055 = vmatpush1.msra.mxu0 0.0
        %1056 = vmatprep.subr.mxu0 0.0
        %1057 = vmatpush1.msra.mxu0 0.0
        %1058 = vmatprep.subr.mxu0 0.0
        %1059 = vmatpush1.msra.mxu0 0.0
        %1060 = vmatprep.subr.mxu0 0.0
        %1061 = vmatpush1.msra.mxu0 %v1035
        %1062 = vmatprep.subr.mxu0 0.0
        %1063 = vmatpush1.msra.mxu0 %v1034
        %1064 = vmatprep.subr.mxu0 0.0
        %1065 = vmatpush1.msra.mxu0 %v1033
        %1066 = vmatprep.subr.mxu0 0.0
        %1067 = vmatpush1.msra.mxu0 %v1032
        %1068 = vmatprep.subr.mxu0 0.0
        %1069 = vmatpush2.msra.mxu0 0.0
        %1070 = vmatprep.subr.mxu0 0.0
        %1071 = vmatpush2.msra.mxu0 0.0
        %1072 = vmatprep.subr.mxu0 0.0
        %1073 = vmatpush2.msra.mxu0 0.0
        %1074 = vmatprep.subr.mxu0 0.0
        %1075 = vmatpush2.msra.mxu0 0.0
        %1076 = vmatprep.subr.mxu0 0.0
        %1077 = vmatpush2.msra.mxu0 0.0
        %1078 = vmatprep.subr.mxu0 0.0
        %1079 = vmatpush2.msra.mxu0 0.0
        %1080 = vmatprep.subr.mxu0 0.0
        %1081 = vmatpush2.msra.mxu0 0.0
        %1082 = vmatprep.subr.mxu0 0.0
        %1083 = vmatpush2.msra.mxu0 0.0
        %1084 = vmatprep.subr.mxu0 0.0
        %1085 = vmatpush2.msra.mxu0 0.0
        %1086 = vmatprep.subr.mxu0 0.0
        %1087 = vmatpush2.msra.mxu0 0.0
        %1088 = vmatprep.subr.mxu0 0.0
        %1089 = vmatpush2.msra.mxu0 0.0
        %1090 = vmatprep.subr.mxu0 0.0
        %1091 = vmatpush2.msra.mxu0 0.0
        %1092 = vmatprep.subr.mxu0 0.0
        %1093 = vmatpush2.msra.mxu0 0.0
        %1094 = vmatprep.subr.mxu0 0.0
        %1095 = vmatpush2.msra.mxu0 0.0
        %1096 = vmatprep.subr.mxu0 0.0
        %1097 = vmatpush2.msra.mxu0 0.0
        %1098 = vmatprep.subr.mxu0 0.0
        %1099 = vmatpush2.msra.mxu0 0.0
        %1100 = vmatprep.mubr.f32.mxu0 0.0
        %1101 = vmatmul.mubr.f32.gmra.mxu0 %v454
        %v1102 = vpop.f32.mrf.mxu0
        %v1103 = vadd.f32 0.0, %v1102
        %v1104 = vpop.f32.mrf.mxu0
        %1105 = vdwg.mxu0
        %vm1114 = vcmask 1041409
        %v1115 = vsel %vm1114, %v985, %v978
        %vm1116 = vcmask 1042434
        %v1117 = vsel %vm1116, %v992, %v1115
        %vm1118 = vcmask 1043459
        %v1119 = vsel %vm1118, %v999, %v1117
        %vm1120 = vcmask 1044484
        %v1121 = vsel %vm1120, %v1006, %v1119
        %vm1122 = vcmask 1045509
        %v1123 = vsel %vm1122, %v1013, %v1121
        %vm1124 = vcmask 1046534
        %v1125 = vsel %vm1124, %v1020, %v1123
        %vm1126 = vcmask 1047559
        %v1127 = vsel %vm1126, %v1027, %v1125
        %1128 = vrot.lane.b32.xlu0 %v1127, 96
        %v1129 = vpop.permute.xlu0 %1128
        %v1130 = vsel %vm452, %v1129, 0
        %1132 = vmatprep.subr.mxu0 0.0
        %1133 = vmatpush1.msra.mxu0 0.0
        %1134 = vmatprep.subr.mxu0 0.0
        %1135 = vmatpush1.msra.mxu0 0.0
        %1136 = vmatprep.subr.mxu0 0.0
        %1137 = vmatpush1.msra.mxu0 0.0
        %1138 = vmatprep.subr.mxu0 0.0
        %1139 = vmatpush1.msra.mxu0 0.0
        %1140 = vmatprep.subr.mxu0 0.0
        %1141 = vmatpush1.msra.mxu0 0.0
        %1142 = vmatprep.subr.mxu0 0.0
        %1143 = vmatpush1.msra.mxu0 0.0
        %1144 = vmatprep.subr.mxu0 0.0
        %1145 = vmatpush1.msra.mxu0 0.0
        %1146 = vmatprep.subr.mxu0 0.0
        %1147 = vmatpush1.msra.mxu0 0.0
        %1148 = vmatprep.subr.mxu0 0.0
        %1149 = vmatpush1.msra.mxu0 0.0
        %1150 = vmatprep.subr.mxu0 0.0
        %1151 = vmatpush1.msra.mxu0 0.0
        %1152 = vmatprep.subr.mxu0 0.0
        %1153 = vmatpush1.msra.mxu0 0.0
        %1154 = vmatprep.subr.mxu0 0.0
        %1155 = vmatpush1.msra.mxu0 0.0
        %1156 = vmatprep.subr.mxu0 0.0
        %1157 = vmatpush1.msra.mxu0 %v1031
        %1158 = vmatprep.subr.mxu0 0.0
        %1159 = vmatpush1.msra.mxu0 %v1030
        %1160 = vmatprep.subr.mxu0 0.0
        %1161 = vmatpush1.msra.mxu0 %v1029
        %1162 = vmatprep.subr.mxu0 0.0
        %1163 = vmatpush1.msra.mxu0 %v1028
        %1164 = vmatprep.subr.mxu0 0.0
        %1165 = vmatpush2.msra.mxu0 0.0
        %1166 = vmatprep.subr.mxu0 0.0
        %1167 = vmatpush2.msra.mxu0 0.0
        %1168 = vmatprep.subr.mxu0 0.0
        %1169 = vmatpush2.msra.mxu0 0.0
        %1170 = vmatprep.subr.mxu0 0.0
        %1171 = vmatpush2.msra.mxu0 0.0
        %1172 = vmatprep.subr.mxu0 0.0
        %1173 = vmatpush2.msra.mxu0 0.0
        %1174 = vmatprep.subr.mxu0 0.0
        %1175 = vmatpush2.msra.mxu0 0.0
        %1176 = vmatprep.subr.mxu0 0.0
        %1177 = vmatpush2.msra.mxu0 0.0
        %1178 = vmatprep.subr.mxu0 0.0
        %1179 = vmatpush2.msra.mxu0 0.0
        %1180 = vmatprep.subr.mxu0 0.0
        %1181 = vmatpush2.msra.mxu0 0.0
        %1182 = vmatprep.subr.mxu0 0.0
        %1183 = vmatpush2.msra.mxu0 0.0
        %1184 = vmatprep.subr.mxu0 0.0
        %1185 = vmatpush2.msra.mxu0 0.0
        %1186 = vmatprep.subr.mxu0 0.0
        %1187 = vmatpush2.msra.mxu0 0.0
        %1188 = vmatprep.subr.mxu0 0.0
        %1189 = vmatpush2.msra.mxu0 0.0
        %1190 = vmatprep.subr.mxu0 0.0
        %1191 = vmatpush2.msra.mxu0 0.0
        %1192 = vmatprep.subr.mxu0 0.0
        %1193 = vmatpush2.msra.mxu0 0.0
        %1194 = vmatprep.subr.mxu0 0.0
        %1195 = vmatpush2.msra.mxu0 0.0
        %1196 = vmatprep.mubr.f32.mxu0 0.0
        %1197 = vmatmul.mubr.f32.gmra.mxu0 %v1130
        %v1198 = vpop.f32.mrf.mxu0
        %v1199 = vadd.f32 %v1103, %v1198
        %v1200 = vpop.f32.mrf.mxu0
        %1201 = vdwg.mxu0
        %v1202 = vld [vmem:[%s9] sm:$0x1]
        %v1204 = vlaneseq
        %v1205 = vshrl.u32 %v1204, 7
        %v1206 = vsub.s32 0, %v1205
        %v1207 = vrot.slane %v1202, %v1206
        %v1209 = vadd.f32 %v1199, %v1207
        %v1210 = vmax.f32 %v1209, 0.0
        %1211 = vadd.xlane.f32.xlu0 %v1210
        %v1212 = vpop.xlane.xlu0 %1211
        %v1213 = vmul.f32 %v1210, %v1210
        %1214 = vadd.xlane.f32.xlu0 %v1213
        %v1215 = vpop.xlane.xlu0 %1214
        %v1216 = vmul.f32 %v1212, 0.03125
        %v1217 = vmul.f32 %v1215, 0.03125
        %v1218 = vmul.f32 %v1216, %v1216
        %v1219 = vsub.f32 %v1217, %v1218
        %v1220 = vsub.f32 %v1210, %v1216
        %v1221 = vadd.f32 %v1219, 1e-05
        %v1222 = vrsqrt.pop %v1221
        %v1223 = vmul.f32 %v1220, %v1222
        %v1224 = vld [vmem:[%s10] sm:$0x1]
        %v1226 = vlaneseq
        %v1227 = vshrl.u32 %v1226, 7
        %v1228 = vsub.s32 0, %v1227
        %v1229 = vrot.slane %v1224, %v1228
        %v1231 = vmul.f32 %v1223, %v1229
        %v1232 = vld [vmem:[%s11] sm:$0x1]
        %v1234 = vlaneseq
        %v1235 = vshrl.u32 %v1234, 7
        %v1236 = vsub.s32 0, %v1235
        %v1237 = vrot.slane %v1232, %v1236
        %v1239 = vadd.f32 %v1231, %v1237
        %1240 = vst [vmem:[%s421] sm:$0xff] %v1239
        %s1241 = sand.u32 %s297, 1
        %s1242 = scalar_lea.sflag [#allocation4], %s1241
        %s1243 = sand.u32 %s297, 1
        %s1244 = smul.addr %s1243, 8
        %s1245 = scalar_lea.vmem [#allocation3], %s1244
        // Predicated region
        $region69: #{tpu_custom_call.1} parent=67 // pred_check
          %p1246 = pneg %p307
        $region70: #{tpu_custom_call.1} parent=67 // pred_check_branch
          %1248 = sbr.rel (%p1246) target = $region72
        $region71: #{tpu_custom_call.1} parent=67 // pred_region
          %s1250 = ssub.s32 128, 128
          %1251 = vsyncadd %s1242, %s1250
          %s1252 = smul.addr %s27, 128
          %s1253 = scalar_lea.hbm %s12, %s1252
          %s1255 = sshll.u32 %s1245, 4
          %s1256 = int_to_ptr.vmem [resolvable:$true] %s1255
          %1258 = dma.vmem_to_hbm [thread:$0]  %s1256, 128, %s1253, %s1242
        $region72: #{tpu_custom_call.1} parent=67 // pred_fallthru
          _
      $region68: #{tpu_custom_call.1} parent=5 // pred_fallthru
        _
      %p1259 = scmp.le.s32.totalorder 2, %s22
      // Predicated region
      $region73: #{tpu_custom_call.1} parent=5 // pred_check
        %p1260 = pneg %p1259
      $region74: #{tpu_custom_call.1} parent=5 // pred_check_branch
        %1262 = sbr.rel (%p1260) target = $region76
      $region75: #{tpu_custom_call.1} parent=5 // pred_region
        %s1263 = ssub.s32 %s22, 2
        // Predicated region
        $region77: #{tpu_custom_call.1} parent=75 // pred_check
          %p1264 = pneg %p313
        $region78: #{tpu_custom_call.1} parent=75 // pred_check_branch
          %1266 = sbr.rel (%p1264) target = $region80
        $region79: #{tpu_custom_call.1} parent=75 // pred_region
          %s1267 = sand.u32 %s298, 1
          %s1268 = scalar_lea.sflag [#allocation4], %s1267
          %s1269 = sand.u32 %s298, 1
          %s1270 = smul.addr %s1269, 8
          %s1271 = scalar_lea.vmem [#allocation3], %s1270
          %1272 = dma.done %s1268, 128
        $region80: #{tpu_custom_call.1} parent=75 // pred_fallthru
          _
      $region76: #{tpu_custom_call.1} parent=5 // pred_fallthru
        _
    $region6: #{tpu_custom_call.1} parent=1 // loop_footer
      %s26 = sadd.s32 1, %s22
    $region7: #{tpu_custom_call.1} parent=1 // loop_footer_branch
      %21 = sbr.rel target = $region3
    $region8: #{tpu_custom_call.1} parent=1 // loop_exit
      _
    %1273 = vsyncpa [#allocation4], 1
    %s1274 = scalar_lea.sflag [#allocation4], 1
    %1275 = vsyncpa %s1274, 1

</llo_original>
